<compile_context>
chip_gen: v7x
topology: tpu7x:2x2x1
jax: 0.10.0
libtpu: 0.0.40
codegen_flags: <defaults>
</compile_context>

<pallas_src>
import functools

import jax
import jax.numpy as jnp
from jax.experimental import pallas as pl
from jax.experimental.pallas import tpu as pltpu


# ----------------------------------------------------------------------------
# Fused per-graph kernel:
#   4x ( adj @ (h @ W) + b, ReLU )  ->  optional mask  ->  fc  ->  softmax
# ----------------------------------------------------------------------------
def _gcn4_kernel(x_ref, adj_ref,
                 w1_ref, b1_ref, w2_ref, b2_ref,
                 w3_ref, b3_ref, w4_ref, b4_ref,
                 fcw_ref, fcb_ref, *rest, use_mask):
    if use_mask:
        mask_ref, out_ref = rest
    else:
        (out_ref,) = rest

    adj = adj_ref[...]                                   # (N, N) bf16

    def gc_layer(h_bf16, w_ref, b_ref):
        # support = h @ W    (MXU, f32 accumulation)
        support = jnp.dot(h_bf16, w_ref[...], preferred_element_type=jnp.float32)
        # aggregate = adj @ support
        agg = jnp.dot(adj, support.astype(jnp.bfloat16),
                      preferred_element_type=jnp.float32)
        return jnp.maximum(agg + b_ref[...], 0.0)        # bias + ReLU in f32

    h = gc_layer(x_ref[...], w1_ref, b1_ref)
    # F.dropout(..., training=False) is identity at inference.
    h = gc_layer(h.astype(jnp.bfloat16), w2_ref, b2_ref)
    h = gc_layer(h.astype(jnp.bfloat16), w3_ref, b3_ref)
    h = gc_layer(h.astype(jnp.bfloat16), w4_ref, b4_ref)  # (N, nclass) f32, ReLU'd

    if use_mask:
        h = h * mask_ref[...]                             # (N, nclass)

    # fc:  logits[c] = sum_{n,j} h[n, j] * fc_w[n*nclass + j, c]
    # fcw_ref is pre-arranged on the host as (nclass, N, nout):
    #   fcw_ref[j, n, c] = fc_w[n*nclass + j, c]
    # so per static class-channel j this is an elementwise multiply + sublane reduce.
    nclass = fcw_ref.shape[0]
    logits = fcb_ref[...]                                 # (1, nout)
    for j in range(nclass):                               # nclass is static & tiny
        logits = logits + jnp.sum(h[:, j:j + 1] * fcw_ref[j],
                                  axis=0, keepdims=True)

    m = jnp.max(logits, axis=-1, keepdims=True)
    e = jnp.exp(logits - m)
    out_ref[...] = (e / jnp.sum(e, axis=-1, keepdims=True)).astype(out_ref.dtype)


# ----------------------------------------------------------------------------
# Full forward pass.  Embedding gathers / concat / fc-weight re-layout are plain JAX.
# ----------------------------------------------------------------------------
def gcn4_forward(params, element, hcount, charge, adj, aromatic=None, mask=None):
    feats = [
        params["em_element"][element],   # (B, N, E)
        params["em_hcount"][hcount],     # (B, N, E)
        params["em_charge"][charge],     # (B, N, E)
    ]
    if aromatic is not None:
        feats.append(params["em_aromatic"][aromatic])
    x = jnp.concatenate(feats, axis=2).astype(jnp.float32)          # (B, N, F)

    B, N, F = x.shape
    H1 = params["gc1_w"].shape[1]
    H2 = params["gc2_w"].shape[1]
    H3 = params["gc3_w"].shape[1]
    nclass = params["gc4_w"].shape[1]
    nout = params["fc_w"].shape[1]
    use_mask = mask is not None

    # bf16 matmul operands (MXU-native), f32 accumulation inside the kernel.
    x_bf = x.astype(jnp.bfloat16)
    adj_bf = adj.astype(jnp.bfloat16)

    def bf16(w):
        return w.astype(jnp.bfloat16)

    # fc weight rearranged so the kernel never reshapes:
    #   fcw_r[j, n, c] = fc_w[n*nclass + j, c]
    fcw_r = params["fc_w"].reshape(N, nclass, nout).transpose(1, 0, 2)
    fcw_r = fcw_r.astype(jnp.float32)                               # (nclass, N, nout)

    args = [x_bf, adj_bf,
            bf16(params["gc1_w"]), params["gc1_b"].reshape(1, -1),
            bf16(params["gc2_w"]), params["gc2_b"].reshape(1, -1),
            bf16(params["gc3_w"]), params["gc3_b"].reshape(1, -1),
            bf16(params["gc4_w"]), params["gc4_b"].reshape(1, -1),
            fcw_r, params["fc_b"].reshape(1, -1)]

    dims = [F, H1, H2, H3, nclass]
    in_specs = [
        pl.BlockSpec((None, N, F), lambda b: (b, 0, 0)),            # x (per batch)
        pl.BlockSpec((None, N, N), lambda b: (b, 0, 0)),            # adj (per batch)
    ]
    for fin, fout in zip(dims[:-1], dims[1:]):                      # weights/biases:
        in_specs.append(pl.BlockSpec((fin, fout), lambda b: (0, 0)))    # resident
        in_specs.append(pl.BlockSpec((1, fout), lambda b: (0, 0)))      # across grid
    in_specs.append(pl.BlockSpec((nclass, N, nout), lambda b: (0, 0, 0)))  # fc weight
    in_specs.append(pl.BlockSpec((1, nout), lambda b: (0, 0)))             # fc bias

    if use_mask:
        args.append(mask.reshape(B, N, nclass).astype(jnp.float32))
        in_specs.append(pl.BlockSpec((None, N, nclass), lambda b: (b, 0, 0)))

    # Advisory cost estimate so XLA can overlap this tiny kernel with the
    # surrounding embedding gathers / concat.
    flops = 0
    for fin, fout in zip(dims[:-1], dims[1:]):
        flops += 2 * B * N * fin * fout      # support matmul
        flops += 2 * B * N * N * fout        # adjacency matmul
    flops += 2 * B * N * nclass * nout       # fc
    bytes_accessed = sum(int(a.size) * a.dtype.itemsize for a in args) + B * nout * 4

    out = pl.pallas_call(
        functools.partial(_gcn4_kernel, use_mask=use_mask),
        grid=(B,),
        in_specs=in_specs,
        out_specs=pl.BlockSpec((None, 1, nout), lambda b: (b, 0, 0)),
        out_shape=jax.ShapeDtypeStruct((B, 1, nout), jnp.float32),
        cost_estimate=pl.CostEstimate(flops=int(flops),
                                      transcendentals=int(B * nout),
                                      bytes_accessed=int(bytes_accessed)),
        compiler_params=pltpu.CompilerParams(
            dimension_semantics=("parallel",),
            vmem_limit_bytes=32 * 1024 * 1024),
    )(*args)
    return out.reshape(B, nout)


# ----------------------------------------------------------------------------
# Pure-JAX reference (mirrors the PyTorch module at inference time)
# ----------------------------------------------------------------------------
def gcn4_reference(params, element, hcount, charge, adj, aromatic=None, mask=None):
    feats = [params["em_element"][element],
             params["em_hcount"][hcount],
             params["em_charge"][charge]]
    if aromatic is not None:
        feats.append(params["em_aromatic"][aromatic])
    x = jnp.concatenate(feats, axis=2).astype(jnp.float32)

    def layer(h, w, b):
        return jax.nn.relu(jnp.einsum('bij,bjh->bih', adj, h @ w) + b)

    h = layer(x, params["gc1_w"], params["gc1_b"])
    h = layer(h, params["gc2_w"], params["gc2_b"])
    h = layer(h, params["gc3_w"], params["gc3_b"])
    h = layer(h, params["gc4_w"], params["gc4_b"])      # ReLU on gc4 (per spec)
    flat = h.reshape(h.shape[0], -1)
    if mask is not None:
        flat = flat * mask
    logits = flat @ params["fc_w"] + params["fc_b"]
    return jax.nn.softmax(logits, axis=1)


# ----------------------------------------------------------------------------
# Deterministic synthetic parameters / inputs
# ----------------------------------------------------------------------------
def init_params(key, *, nfeat, nhid_1, nhid_2, nhid_3, nclass, embedding_dim):
    ks = jax.random.split(key, 16)

    def w(k, shape, scale=0.1):
        return (scale * jax.random.normal(k, shape)).astype(jnp.float32)

    return {
        "em_element":  w(ks[0], (54, embedding_dim)),
        "em_hcount":   w(ks[1], (6, embedding_dim)),
        "em_charge":   w(ks[2], (7, embedding_dim)),
        "em_aromatic": w(ks[3], (3, embedding_dim)),
        "gc1_w": w(ks[4], (nfeat, nhid_1)),
        "gc1_b": w(ks[5], (nhid_1,)),
        "gc2_w": w(ks[6], (nhid_1, nhid_2)),
        "gc2_b": w(ks[7], (nhid_2,)),
        "gc3_w": w(ks[8], (nhid_2, nhid_3)),
        "gc3_b": w(ks[9], (nhid_3,)),
        "gc4_w": w(ks[10], (nhid_3, nclass)),
        "gc4_b": w(ks[11], (nclass,)),
        # Linear(132, 2): stored already transposed as (132, 2) so we do x @ W.
        "fc_w": w(ks[12], (132, 2)),
        "fc_b": w(ks[13], (2,)),
    }


if __name__ == "__main__":
    # N_nodes * nclass must equal 132 (the nn.Linear(132, 2) input size).
    B = 2
    N = 66
    EMB = 8
    NFEAT = 3 * EMB          # aromatic=None path -> concat of 3 embeddings
    NHID1, NHID2, NHID3 = 32, 32, 16
    NCLASS = 2

    root = jax.random.PRNGKey(0)
    kp, k1, k2, k3, k4, k5 = jax.random.split(root, 6)

    params = init_params(kp, nfeat=NFEAT, nhid_1=NHID1, nhid_2=NHID2,
                         nhid_3=NHID3, nclass=NCLASS, embedding_dim=EMB)

    element = jax.random.randint(k1, (B, N), 0, 54, dtype=jnp.int32)
    hcount = jax.random.randint(k2, (B, N), 0, 6, dtype=jnp.int32)
    charge = jax.random.randint(k3, (B, N), 0, 7, dtype=jnp.int32)
    adj_raw = jax.random.uniform(k4, (B, N, N), dtype=jnp.float32)
    adj = adj_raw / jnp.sum(adj_raw, axis=-1, keepdims=True)   # row-normalized
    mask = (jax.random.uniform(k5, (B, N * NCLASS)) > 0.3).astype(jnp.float32)

    # --- no-mask path ---
    fwd = jax.jit(lambda p, e, h, c, a: gcn4_forward(p, e, h, c, a,
                                                     aromatic=None, mask=None))
    out = jax.block_until_ready(fwd(params, element, hcount, charge, adj))
    assert out.shape == (B, 2)
    assert bool(jnp.all(jnp.abs(jnp.sum(out, axis=1) - 1.0) < 1e-5))
    ref = gcn4_reference(params, element, hcount, charge, adj)
    assert bool(jnp.allclose(out, ref, atol=3e-2)), "mismatch vs reference (no mask)"

    # --- masked path ---
    fwd_m = jax.jit(lambda p, e, h, c, a, m: gcn4_forward(p, e, h, c, a,
                                                          aromatic=None, mask=m))
    out_m = jax.block_until_ready(fwd_m(params, element, hcount, charge, adj, mask))
    ref_m = gcn4_reference(params, element, hcount, charge, adj, mask=mask)
    assert out_m.shape == (B, 2)
    assert bool(jnp.allclose(out_m, ref_m, atol=3e-2)), "mismatch vs reference (mask)"

    print("KERNEL_OK")
</pallas_src>

<mosaic_0001>
module attributes {stable_mosaic.version = 11 : i64} {
  func.func @_gcn4_kernel(%arg0: i32, %arg1: memref<1x66x24xbf16, #tpu.memory_space<vmem>>, %arg2: memref<1x66x66xbf16, #tpu.memory_space<vmem>>, %arg3: memref<24x32xbf16, #tpu.memory_space<vmem>>, %arg4: memref<1x32xf32, #tpu.memory_space<vmem>>, %arg5: memref<32x32xbf16, #tpu.memory_space<vmem>>, %arg6: memref<1x32xf32, #tpu.memory_space<vmem>>, %arg7: memref<32x16xbf16, #tpu.memory_space<vmem>>, %arg8: memref<1x16xf32, #tpu.memory_space<vmem>>, %arg9: memref<16x2xbf16, #tpu.memory_space<vmem>>, %arg10: memref<1x2xf32, #tpu.memory_space<vmem>>, %arg11: memref<2x66x2xf32, #tpu.memory_space<vmem>>, %arg12: memref<1x2xf32, #tpu.memory_space<vmem>>, %arg13: memref<1x1x2xf32, #tpu.memory_space<vmem>>) attributes {dimension_semantics = [#tpu.dimension_semantics<parallel>], iteration_bounds = array<i64: 2>, scalar_prefetch = 0 : i64, scratch_operands = 0 : i64, tpu.core_type = #tpu.core_type<tc>, window_params = [{transform_indices = @transform_0, window_bounds = array<i64: 1, 66, 24>}, {transform_indices = @transform_1, window_bounds = array<i64: 1, 66, 66>}, {pipeline_mode = #tpu.pipeline_mode<synchronous>, transform_indices = @transform_2, window_bounds = array<i64: 24, 32>}, {pipeline_mode = #tpu.pipeline_mode<synchronous>, transform_indices = @transform_3, window_bounds = array<i64: 1, 32>}, {pipeline_mode = #tpu.pipeline_mode<synchronous>, transform_indices = @transform_4, window_bounds = array<i64: 32, 32>}, {pipeline_mode = #tpu.pipeline_mode<synchronous>, transform_indices = @transform_5, window_bounds = array<i64: 1, 32>}, {pipeline_mode = #tpu.pipeline_mode<synchronous>, transform_indices = @transform_6, window_bounds = array<i64: 32, 16>}, {pipeline_mode = #tpu.pipeline_mode<synchronous>, transform_indices = @transform_7, window_bounds = array<i64: 1, 16>}, {pipeline_mode = #tpu.pipeline_mode<synchronous>, transform_indices = @transform_8, window_bounds = array<i64: 16, 2>}, {pipeline_mode = #tpu.pipeline_mode<synchronous>, transform_indices = @transform_9, window_bounds = array<i64: 1, 2>}, {pipeline_mode = #tpu.pipeline_mode<synchronous>, transform_indices = @transform_10, window_bounds = array<i64: 2, 66, 2>}, {pipeline_mode = #tpu.pipeline_mode<synchronous>, transform_indices = @transform_11, window_bounds = array<i64: 1, 2>}, {transform_indices = @transform_12, window_bounds = array<i64: 1, 1, 2>}]} {
    %c0 = arith.constant 0 : index
    %c0_0 = arith.constant 0 : index
    %c0_1 = arith.constant 0 : index
    %0 = vector.load %arg2[%c0, %c0_0, %c0_1] : memref<1x66x66xbf16, #tpu.memory_space<vmem>>, vector<1x66x66xbf16>
    %1 = vector.shape_cast %0 : vector<1x66x66xbf16> to vector<66x66xbf16>
    %c0_2 = arith.constant 0 : index
    %c0_3 = arith.constant 0 : index
    %c0_4 = arith.constant 0 : index
    %2 = vector.load %arg1[%c0_2, %c0_3, %c0_4] : memref<1x66x24xbf16, #tpu.memory_space<vmem>>, vector<1x66x24xbf16>
    %3 = vector.shape_cast %2 : vector<1x66x24xbf16> to vector<66x24xbf16>
    %c0_5 = arith.constant 0 : index
    %c0_6 = arith.constant 0 : index
    %4 = vector.load %arg3[%c0_5, %c0_6] : memref<24x32xbf16, #tpu.memory_space<vmem>>, vector<24x32xbf16>
    %cst = arith.constant dense<0.000000e+00> : vector<66x32xf32>
    %5 = tpu.matmul %3, %4, %cst {dimension_numbers = #tpu.dot_dimension_numbers<[1], [0], [0], [1], [0, 0, 1, 1], [], []>} : vector<66x24xbf16>, vector<24x32xbf16>, vector<66x32xf32> -> vector<66x32xf32>
    %6 = arith.truncf %5 : vector<66x32xf32> to vector<66x32xbf16>
    %cst_7 = arith.constant dense<0.000000e+00> : vector<66x32xf32>
    %7 = tpu.matmul %1, %6, %cst_7 {dimension_numbers = #tpu.dot_dimension_numbers<[1], [0], [0], [1], [0, 0, 1, 1], [], []>} : vector<66x66xbf16>, vector<66x32xbf16>, vector<66x32xf32> -> vector<66x32xf32>
    %c0_8 = arith.constant 0 : index
    %c0_9 = arith.constant 0 : index
    %8 = vector.load %arg4[%c0_8, %c0_9] : memref<1x32xf32, #tpu.memory_space<vmem>>, vector<1x32xf32>
    %9 = vector.broadcast %8 : vector<1x32xf32> to vector<66x32xf32>
    %10 = arith.addf %7, %9 : vector<66x32xf32>
    %cst_10 = arith.constant 0.000000e+00 : f32
    %11 = vector.broadcast %cst_10 : f32 to vector<66x32xf32>
    %12 = arith.maximumf %10, %11 : vector<66x32xf32>
    %13 = arith.truncf %12 : vector<66x32xf32> to vector<66x32xbf16>
    %c0_11 = arith.constant 0 : index
    %c0_12 = arith.constant 0 : index
    %14 = vector.load %arg5[%c0_11, %c0_12] : memref<32x32xbf16, #tpu.memory_space<vmem>>, vector<32x32xbf16>
    %cst_13 = arith.constant dense<0.000000e+00> : vector<66x32xf32>
    %15 = tpu.matmul %13, %14, %cst_13 {dimension_numbers = #tpu.dot_dimension_numbers<[1], [0], [0], [1], [0, 0, 1, 1], [], []>} : vector<66x32xbf16>, vector<32x32xbf16>, vector<66x32xf32> -> vector<66x32xf32>
    %16 = arith.truncf %15 : vector<66x32xf32> to vector<66x32xbf16>
    %cst_14 = arith.constant dense<0.000000e+00> : vector<66x32xf32>
    %17 = tpu.matmul %1, %16, %cst_14 {dimension_numbers = #tpu.dot_dimension_numbers<[1], [0], [0], [1], [0, 0, 1, 1], [], []>} : vector<66x66xbf16>, vector<66x32xbf16>, vector<66x32xf32> -> vector<66x32xf32>
    %c0_15 = arith.constant 0 : index
    %c0_16 = arith.constant 0 : index
    %18 = vector.load %arg6[%c0_15, %c0_16] : memref<1x32xf32, #tpu.memory_space<vmem>>, vector<1x32xf32>
    %19 = vector.broadcast %18 : vector<1x32xf32> to vector<66x32xf32>
    %20 = arith.addf %17, %19 : vector<66x32xf32>
    %cst_17 = arith.constant 0.000000e+00 : f32
    %21 = vector.broadcast %cst_17 : f32 to vector<66x32xf32>
    %22 = arith.maximumf %20, %21 : vector<66x32xf32>
    %23 = arith.truncf %22 : vector<66x32xf32> to vector<66x32xbf16>
    %c0_18 = arith.constant 0 : index
    %c0_19 = arith.constant 0 : index
    %24 = vector.load %arg7[%c0_18, %c0_19] : memref<32x16xbf16, #tpu.memory_space<vmem>>, vector<32x16xbf16>
    %cst_20 = arith.constant dense<0.000000e+00> : vector<66x16xf32>
    %25 = tpu.matmul %23, %24, %cst_20 {dimension_numbers = #tpu.dot_dimension_numbers<[1], [0], [0], [1], [0, 0, 1, 1], [], []>} : vector<66x32xbf16>, vector<32x16xbf16>, vector<66x16xf32> -> vector<66x16xf32>
    %26 = arith.truncf %25 : vector<66x16xf32> to vector<66x16xbf16>
    %cst_21 = arith.constant dense<0.000000e+00> : vector<66x16xf32>
    %27 = tpu.matmul %1, %26, %cst_21 {dimension_numbers = #tpu.dot_dimension_numbers<[1], [0], [0], [1], [0, 0, 1, 1], [], []>} : vector<66x66xbf16>, vector<66x16xbf16>, vector<66x16xf32> -> vector<66x16xf32>
    %c0_22 = arith.constant 0 : index
    %c0_23 = arith.constant 0 : index
    %28 = vector.load %arg8[%c0_22, %c0_23] : memref<1x16xf32, #tpu.memory_space<vmem>>, vector<1x16xf32>
    %29 = vector.broadcast %28 : vector<1x16xf32> to vector<66x16xf32>
    %30 = arith.addf %27, %29 : vector<66x16xf32>
    %cst_24 = arith.constant 0.000000e+00 : f32
    %31 = vector.broadcast %cst_24 : f32 to vector<66x16xf32>
    %32 = arith.maximumf %30, %31 : vector<66x16xf32>
    %33 = arith.truncf %32 : vector<66x16xf32> to vector<66x16xbf16>
    %c0_25 = arith.constant 0 : index
    %c0_26 = arith.constant 0 : index
    %34 = vector.load %arg9[%c0_25, %c0_26] : memref<16x2xbf16, #tpu.memory_space<vmem>>, vector<16x2xbf16>
    %cst_27 = arith.constant dense<0.000000e+00> : vector<66x2xf32>
    %35 = tpu.matmul %33, %34, %cst_27 {dimension_numbers = #tpu.dot_dimension_numbers<[1], [0], [0], [1], [0, 0, 1, 1], [], []>} : vector<66x16xbf16>, vector<16x2xbf16>, vector<66x2xf32> -> vector<66x2xf32>
    %36 = arith.truncf %35 : vector<66x2xf32> to vector<66x2xbf16>
    %cst_28 = arith.constant dense<0.000000e+00> : vector<66x2xf32>
    %37 = tpu.matmul %1, %36, %cst_28 {dimension_numbers = #tpu.dot_dimension_numbers<[1], [0], [0], [1], [0, 0, 1, 1], [], []>} : vector<66x66xbf16>, vector<66x2xbf16>, vector<66x2xf32> -> vector<66x2xf32>
    %c0_29 = arith.constant 0 : index
    %c0_30 = arith.constant 0 : index
    %38 = vector.load %arg10[%c0_29, %c0_30] : memref<1x2xf32, #tpu.memory_space<vmem>>, vector<1x2xf32>
    %39 = vector.broadcast %38 : vector<1x2xf32> to vector<66x2xf32>
    %40 = arith.addf %37, %39 : vector<66x2xf32>
    %cst_31 = arith.constant 0.000000e+00 : f32
    %41 = vector.broadcast %cst_31 : f32 to vector<66x2xf32>
    %42 = arith.maximumf %40, %41 : vector<66x2xf32>
    %c0_32 = arith.constant 0 : index
    %c0_33 = arith.constant 0 : index
    %43 = vector.load %arg12[%c0_32, %c0_33] : memref<1x2xf32, #tpu.memory_space<vmem>>, vector<1x2xf32>
    %44 = vector.extract_strided_slice %42 {offsets = [0, 0], sizes = [66, 1], strides = [1, 1]} : vector<66x2xf32> to vector<66x1xf32>
    %c0_34 = arith.constant 0 : index
    %c0_35 = arith.constant 0 : index
    %c0_36 = arith.constant 0 : index
    %45 = vector.load %arg11[%c0_34, %c0_35, %c0_36] : memref<2x66x2xf32, #tpu.memory_space<vmem>>, vector<1x66x2xf32>
    %46 = vector.shape_cast %45 : vector<1x66x2xf32> to vector<66x2xf32>
    %47 = vector.broadcast %44 : vector<66x1xf32> to vector<66x2xf32>
    %48 = arith.mulf %47, %46 : vector<66x2xf32>
    %cst_37 = arith.constant dense<0.000000e+00> : vector<2xf32>
    %49 = vector.multi_reduction <add>, %48, %cst_37 [0] : vector<66x2xf32> to vector<2xf32>
    %50 = vector.shape_cast %49 : vector<2xf32> to vector<1x2xf32>
    %51 = arith.addf %43, %50 : vector<1x2xf32>
    %52 = vector.extract_strided_slice %42 {offsets = [0, 1], sizes = [66, 1], strides = [1, 1]} : vector<66x2xf32> to vector<66x1xf32>
    %c1 = arith.constant 1 : index
    %c0_38 = arith.constant 0 : index
    %c0_39 = arith.constant 0 : index
    %53 = vector.load %arg11[%c1, %c0_38, %c0_39] : memref<2x66x2xf32, #tpu.memory_space<vmem>>, vector<1x66x2xf32>
    %54 = vector.shape_cast %53 : vector<1x66x2xf32> to vector<66x2xf32>
    %55 = vector.broadcast %52 : vector<66x1xf32> to vector<66x2xf32>
    %56 = arith.mulf %55, %54 : vector<66x2xf32>
    %cst_40 = arith.constant dense<0.000000e+00> : vector<2xf32>
    %57 = vector.multi_reduction <add>, %56, %cst_40 [0] : vector<66x2xf32> to vector<2xf32>
    %58 = vector.shape_cast %57 : vector<2xf32> to vector<1x2xf32>
    %59 = arith.addf %51, %58 : vector<1x2xf32>
    %cst_41 = arith.constant dense<0xFF800000> : vector<1xf32>
    %60 = vector.multi_reduction <maximumf>, %59, %cst_41 [1] : vector<1x2xf32> to vector<1xf32>
    %61 = vector.shape_cast %60 : vector<1xf32> to vector<1x1xf32>
    %62 = vector.broadcast %61 : vector<1x1xf32> to vector<1x2xf32>
    %63 = arith.subf %59, %62 : vector<1x2xf32>
    %64 = math.exp %63 : vector<1x2xf32>
    %cst_42 = arith.constant dense<0.000000e+00> : vector<1xf32>
    %65 = vector.multi_reduction <add>, %64, %cst_42 [1] : vector<1x2xf32> to vector<1xf32>
    %66 = vector.shape_cast %65 : vector<1xf32> to vector<1x1xf32>
    %67 = vector.broadcast %66 : vector<1x1xf32> to vector<1x2xf32>
    %68 = arith.divf %64, %67 : vector<1x2xf32>
    %c0_43 = arith.constant 0 : index
    %c0_44 = arith.constant 0 : index
    %c0_45 = arith.constant 0 : index
    %69 = vector.load %arg13[%c0_43, %c0_44, %c0_45] : memref<1x1x2xf32, #tpu.memory_space<vmem>>, vector<1x1x2xf32>
    %70 = vector.shape_cast %69 : vector<1x1x2xf32> to vector<1x2xf32>
    %71 = vector.shape_cast %68 : vector<1x2xf32> to vector<1x1x2xf32>
    tpu.vector_store %arg13[%c0_43, %c0_44, %c0_45], %71 {strides = array<i32>} : memref<1x1x2xf32, #tpu.memory_space<vmem>>, vector<1x1x2xf32>,
    return
  }
  func.func @transform_0(%arg0: i32) -> (i32, i32, i32) {
    %c0_i32 = arith.constant 0 : i32
    %c0_i32_0 = arith.constant 0 : i32
    %c0_i32_1 = arith.constant 0 : i32
    return %arg0, %c0_i32, %c0_i32_0 : i32, i32, i32
  }
  func.func @transform_1(%arg0: i32) -> (i32, i32, i32) {
    %c0_i32 = arith.constant 0 : i32
    %c0_i32_0 = arith.constant 0 : i32
    %c0_i32_1 = arith.constant 0 : i32
    return %arg0, %c0_i32, %c0_i32_0 : i32, i32, i32
  }
  func.func @transform_2(%arg0: i32) -> (i32, i32) {
    %c0_i32 = arith.constant 0 : i32
    %c0_i32_0 = arith.constant 0 : i32
    %c0_i32_1 = arith.constant 0 : i32
    return %c0_i32, %c0_i32_0 : i32, i32
  }
  func.func @transform_3(%arg0: i32) -> (i32, i32) {
    %c0_i32 = arith.constant 0 : i32
    %c0_i32_0 = arith.constant 0 : i32
    %c0_i32_1 = arith.constant 0 : i32
    return %c0_i32, %c0_i32_0 : i32, i32
  }
  func.func @transform_4(%arg0: i32) -> (i32, i32) {
    %c0_i32 = arith.constant 0 : i32
    %c0_i32_0 = arith.constant 0 : i32
    %c0_i32_1 = arith.constant 0 : i32
    return %c0_i32, %c0_i32_0 : i32, i32
  }
  func.func @transform_5(%arg0: i32) -> (i32, i32) {
    %c0_i32 = arith.constant 0 : i32
    %c0_i32_0 = arith.constant 0 : i32
    %c0_i32_1 = arith.constant 0 : i32
    return %c0_i32, %c0_i32_0 : i32, i32
  }
  func.func @transform_6(%arg0: i32) -> (i32, i32) {
    %c0_i32 = arith.constant 0 : i32
    %c0_i32_0 = arith.constant 0 : i32
    %c0_i32_1 = arith.constant 0 : i32
    return %c0_i32, %c0_i32_0 : i32, i32
  }
  func.func @transform_7(%arg0: i32) -> (i32, i32) {
    %c0_i32 = arith.constant 0 : i32
    %c0_i32_0 = arith.constant 0 : i32
    %c0_i32_1 = arith.constant 0 : i32
    return %c0_i32, %c0_i32_0 : i32, i32
  }
  func.func @transform_8(%arg0: i32) -> (i32, i32) {
    %c0_i32 = arith.constant 0 : i32
    %c0_i32_0 = arith.constant 0 : i32
    %c0_i32_1 = arith.constant 0 : i32
    return %c0_i32, %c0_i32_0 : i32, i32
  }
  func.func @transform_9(%arg0: i32) -> (i32, i32) {
    %c0_i32 = arith.constant 0 : i32
    %c0_i32_0 = arith.constant 0 : i32
    %c0_i32_1 = arith.constant 0 : i32
    return %c0_i32, %c0_i32_0 : i32, i32
  }
  func.func @transform_10(%arg0: i32) -> (i32, i32, i32) {
    %c0_i32 = arith.constant 0 : i32
    %c0_i32_0 = arith.constant 0 : i32
    %c0_i32_1 = arith.constant 0 : i32
    %c0_i32_2 = arith.constant 0 : i32
    return %c0_i32, %c0_i32_0, %c0_i32_1 : i32, i32, i32
  }
  func.func @transform_11(%arg0: i32) -> (i32, i32) {
    %c0_i32 = arith.constant 0 : i32
    %c0_i32_0 = arith.constant 0 : i32
    %c0_i32_1 = arith.constant 0 : i32
    return %c0_i32, %c0_i32_0 : i32, i32
  }
  func.func @transform_12(%arg0: i32) -> (i32, i32, i32) {
    %c0_i32 = arith.constant 0 : i32
    %c0_i32_0 = arith.constant 0 : i32
    %c0_i32_1 = arith.constant 0 : i32
    return %arg0, %c0_i32, %c0_i32_0 : i32, i32, i32
  }
}

</mosaic_0001>

<llo_original>
// kernel: _lambda_.1
$region0: #{_lambda_.1}
  #allocation0 [shape = 'u32[]', space=smem, size = 0x4, offset = 0x4, fixed_abs, tag = 'smem constant byte address 0x4 - core index']
  #allocation1 [shape = 'u32[144,128]{1,0:T(1,128)}', space=vmem, size = 0x12000, scoped, tag = 'internal scratch']
  %s0 = inlined_call_operand.vmem [shape: bf16[2,66,24], index: 0, kind: input, shape index: {}]
  %s1 = inlined_call_operand.vmem [shape: bf16[2,66,66], index: 1, kind: input, shape index: {}]
  %s2 = inlined_call_operand.vmem [shape: bf16[24,32], index: 2, kind: input, shape index: {}]
  %s3 = inlined_call_operand.vmem [shape: f32[1,32], index: 3, kind: input, shape index: {}]
  %s4 = inlined_call_operand.vmem [shape: bf16[32,32], index: 4, kind: input, shape index: {}]
  %s5 = inlined_call_operand.vmem [shape: f32[1,32], index: 5, kind: input, shape index: {}]
  %s6 = inlined_call_operand.vmem [shape: bf16[32,16], index: 6, kind: input, shape index: {}]
  %s7 = inlined_call_operand.vmem [shape: f32[1,16], index: 7, kind: input, shape index: {}]
  %s8 = inlined_call_operand.vmem [shape: bf16[16,2], index: 8, kind: input, shape index: {}]
  %s9 = inlined_call_operand.vmem [shape: f32[1,2], index: 9, kind: input, shape index: {}]
  %s10 = inlined_call_operand.vmem [shape: f32[2,66,2], index: 10, kind: input, shape index: {}]
  %s11 = inlined_call_operand.vmem [shape: f32[1,2], index: 11, kind: input, shape index: {}]
  %s12 = inlined_call_operand.hbm [shape: f32[2,1,2], index: 12, kind: output, shape index: {}]
  %s13 = sld [smem:[#allocation0]]
  $region81: #{_lambda_.1} parent=0
    _
  %s15 = ssub.s32 1, %s13
  %s16 = scalar_select 0, %s15, %s13
  $region1: #{_lambda_.1} parent=0
    #allocation2 [shape = 'u8[1024]{0}', space=vmem, size = 0x400, scoped, tag = 'output window, operand 0']
    #allocation3 [shape = 's32[2]{0}', space=sflag, size = 0x8, scoped, tag = 'scoped memory for _lambda_.1']
    %17 = vsyncpa [#allocation3], 0
    %s18 = scalar_lea.sflag [#allocation3], 1
    %19 = vsyncpa %s18, 0
    loop: start=0, step=1, limit=4
    $region2: #{_lambda_.1} parent=1 // loop_pre_header
      _
    $region3: #{_lambda_.1} parent=1 // loop_header
      %s21 = sphi 0, %s25
      %p22 = scmp.ge.s32.totalorder %s21, 4
      %s31 = sphi 0, %s33
      %s34 = sphi 0, %s31
      %s35 = sphi 0, %s34
      %s51 = sphi 0, %s35
      %s57 = sphi 0, %s59
      %s60 = sphi 0, %s57
      %s61 = sphi 0, %s60
      %s77 = sphi 0, %s61
      %s81 = sphi 0, %s81
      %s83 = sphi 0, %s81
      %s84 = sphi 0, %s83
      %s98 = sphi 0, %s84
      %s102 = sphi 0, %s102
      %s104 = sphi 0, %s102
      %s105 = sphi 0, %s104
      %s119 = sphi 0, %s105
      %s123 = sphi 0, %s123
      %s125 = sphi 0, %s123
      %s126 = sphi 0, %s125
      %s140 = sphi 0, %s126
      %s144 = sphi 0, %s144
      %s146 = sphi 0, %s144
      %s147 = sphi 0, %s146
      %s161 = sphi 0, %s147
      %s165 = sphi 0, %s165
      %s167 = sphi 0, %s165
      %s168 = sphi 0, %s167
      %s182 = sphi 0, %s168
      %s186 = sphi 0, %s186
      %s188 = sphi 0, %s186
      %s189 = sphi 0, %s188
      %s203 = sphi 0, %s189
      %s207 = sphi 0, %s207
      %s209 = sphi 0, %s207
      %s210 = sphi 0, %s209
      %s224 = sphi 0, %s210
      %s228 = sphi 0, %s228
      %s230 = sphi 0, %s228
      %s231 = sphi 0, %s230
      %s245 = sphi 0, %s231
      %s249 = sphi 0, %s249
      %s251 = sphi 0, %s249
      %s252 = sphi 0, %s251
      %s266 = sphi 0, %s252
      %s270 = sphi 0, %s270
      %s272 = sphi 0, %s270
      %s273 = sphi 0, %s272
      %s287 = sphi 0, %s273
      %s293 = sphi 0, %s295
      %s296 = sphi 0, %s293
      %s297 = sphi 0, %s296
      %s313 = sphi 0, %s297
    $region4: #{_lambda_.1} parent=1 // loop_header_branch
      %24 = sbr.rel (%p22) target = $region8
    $region5: #{_lambda_.1} parent=1 // loop_body
      %s26 = ssub.s32 %s21, 1
      %s27 = ssub.s32 %s21, 2
      %s28 = sadd.s32 %s21, 1
      %s29 = ssub.s32 %s21, %s28
      %p30 = scmp.eq.s32.totalorder %s29, 0
      %s32 = sadd.s32 %s31, 1
      %s33 = scalar_select %p30, %s31, %s32
      %p36 = pneg %p30
      %p37 = scmp.eq.s32.totalorder %s21, 1
      %p38 = por %p36, %p37
      %p39 = scmp.ne.s32.totalorder %s31, %s34
      %p40 = scmp.eq.s32.totalorder %s21, 0
      %p41 = por %p39, %p40
      %p42 = scmp.ne.s32.totalorder %s31, %s34
      %p43 = scmp.eq.s32.totalorder %s26, 1
      %p44 = por %p42, %p43
      %p45 = scmp.ne.s32.totalorder %s34, %s35
      %p46 = scmp.eq.s32.totalorder %s26, 0
      %p47 = por %p45, %p46
      %p48 = scmp.ne.s32.totalorder %s34, %s35
      %p49 = scmp.eq.s32.totalorder %s27, 1
      %p50 = por %p48, %p49
      %p52 = scmp.ne.s32.totalorder %s35, %s51
      %p53 = scmp.eq.s32.totalorder %s27, 0
      %p54 = por %p52, %p53
      %s55 = ssub.s32 %s21, %s28
      %p56 = scmp.eq.s32.totalorder %s55, 0
      %s58 = sadd.s32 %s57, 1
      %s59 = scalar_select %p56, %s57, %s58
      %p62 = pneg %p56
      %p63 = scmp.eq.s32.totalorder %s21, 1
      %p64 = por %p62, %p63
      %p65 = scmp.ne.s32.totalorder %s57, %s60
      %p66 = scmp.eq.s32.totalorder %s21, 0
      %p67 = por %p65, %p66
      %p68 = scmp.ne.s32.totalorder %s57, %s60
      %p69 = scmp.eq.s32.totalorder %s26, 1
      %p70 = por %p68, %p69
      %p71 = scmp.ne.s32.totalorder %s60, %s61
      %p72 = scmp.eq.s32.totalorder %s26, 0
      %p73 = por %p71, %p72
      %p74 = scmp.ne.s32.totalorder %s60, %s61
      %p75 = scmp.eq.s32.totalorder %s27, 1
      %p76 = por %p74, %p75
      %p78 = scmp.ne.s32.totalorder %s61, %s77
      %p79 = scmp.eq.s32.totalorder %s27, 0
      %p80 = por %p78, %p79
      %s82 = sadd.s32 %s81, 1
      %p85 = scmp.eq.s32.totalorder %s21, 1
      %p86 = scmp.ne.s32.totalorder %s81, %s83
      %p87 = scmp.eq.s32.totalorder %s21, 0
      %p88 = por %p86, %p87
      %p89 = scmp.ne.s32.totalorder %s81, %s83
      %p90 = scmp.eq.s32.totalorder %s26, 1
      %p91 = por %p89, %p90
      %p92 = scmp.ne.s32.totalorder %s83, %s84
      %p93 = scmp.eq.s32.totalorder %s26, 0
      %p94 = por %p92, %p93
      %p95 = scmp.ne.s32.totalorder %s83, %s84
      %p96 = scmp.eq.s32.totalorder %s27, 1
      %p97 = por %p95, %p96
      %p99 = scmp.ne.s32.totalorder %s84, %s98
      %p100 = scmp.eq.s32.totalorder %s27, 0
      %p101 = por %p99, %p100
      %s103 = sadd.s32 %s102, 1
      %p106 = scmp.eq.s32.totalorder %s21, 1
      %p107 = scmp.ne.s32.totalorder %s102, %s104
      %p108 = scmp.eq.s32.totalorder %s21, 0
      %p109 = por %p107, %p108
      %p110 = scmp.ne.s32.totalorder %s102, %s104
      %p111 = scmp.eq.s32.totalorder %s26, 1
      %p112 = por %p110, %p111
      %p113 = scmp.ne.s32.totalorder %s104, %s105
      %p114 = scmp.eq.s32.totalorder %s26, 0
      %p115 = por %p113, %p114
      %p116 = scmp.ne.s32.totalorder %s104, %s105
      %p117 = scmp.eq.s32.totalorder %s27, 1
      %p118 = por %p116, %p117
      %p120 = scmp.ne.s32.totalorder %s105, %s119
      %p121 = scmp.eq.s32.totalorder %s27, 0
      %p122 = por %p120, %p121
      %s124 = sadd.s32 %s123, 1
      %p127 = scmp.eq.s32.totalorder %s21, 1
      %p128 = scmp.ne.s32.totalorder %s123, %s125
      %p129 = scmp.eq.s32.totalorder %s21, 0
      %p130 = por %p128, %p129
      %p131 = scmp.ne.s32.totalorder %s123, %s125
      %p132 = scmp.eq.s32.totalorder %s26, 1
      %p133 = por %p131, %p132
      %p134 = scmp.ne.s32.totalorder %s125, %s126
      %p135 = scmp.eq.s32.totalorder %s26, 0
      %p136 = por %p134, %p135
      %p137 = scmp.ne.s32.totalorder %s125, %s126
      %p138 = scmp.eq.s32.totalorder %s27, 1
      %p139 = por %p137, %p138
      %p141 = scmp.ne.s32.totalorder %s126, %s140
      %p142 = scmp.eq.s32.totalorder %s27, 0
      %p143 = por %p141, %p142
      %s145 = sadd.s32 %s144, 1
      %p148 = scmp.eq.s32.totalorder %s21, 1
      %p149 = scmp.ne.s32.totalorder %s144, %s146
      %p150 = scmp.eq.s32.totalorder %s21, 0
      %p151 = por %p149, %p150
      %p152 = scmp.ne.s32.totalorder %s144, %s146
      %p153 = scmp.eq.s32.totalorder %s26, 1
      %p154 = por %p152, %p153
      %p155 = scmp.ne.s32.totalorder %s146, %s147
      %p156 = scmp.eq.s32.totalorder %s26, 0
      %p157 = por %p155, %p156
      %p158 = scmp.ne.s32.totalorder %s146, %s147
      %p159 = scmp.eq.s32.totalorder %s27, 1
      %p160 = por %p158, %p159
      %p162 = scmp.ne.s32.totalorder %s147, %s161
      %p163 = scmp.eq.s32.totalorder %s27, 0
      %p164 = por %p162, %p163
      %s166 = sadd.s32 %s165, 1
      %p169 = scmp.eq.s32.totalorder %s21, 1
      %p170 = scmp.ne.s32.totalorder %s165, %s167
      %p171 = scmp.eq.s32.totalorder %s21, 0
      %p172 = por %p170, %p171
      %p173 = scmp.ne.s32.totalorder %s165, %s167
      %p174 = scmp.eq.s32.totalorder %s26, 1
      %p175 = por %p173, %p174
      %p176 = scmp.ne.s32.totalorder %s167, %s168
      %p177 = scmp.eq.s32.totalorder %s26, 0
      %p178 = por %p176, %p177
      %p179 = scmp.ne.s32.totalorder %s167, %s168
      %p180 = scmp.eq.s32.totalorder %s27, 1
      %p181 = por %p179, %p180
      %p183 = scmp.ne.s32.totalorder %s168, %s182
      %p184 = scmp.eq.s32.totalorder %s27, 0
      %p185 = por %p183, %p184
      %s187 = sadd.s32 %s186, 1
      %p190 = scmp.eq.s32.totalorder %s21, 1
      %p191 = scmp.ne.s32.totalorder %s186, %s188
      %p192 = scmp.eq.s32.totalorder %s21, 0
      %p193 = por %p191, %p192
      %p194 = scmp.ne.s32.totalorder %s186, %s188
      %p195 = scmp.eq.s32.totalorder %s26, 1
      %p196 = por %p194, %p195
      %p197 = scmp.ne.s32.totalorder %s188, %s189
      %p198 = scmp.eq.s32.totalorder %s26, 0
      %p199 = por %p197, %p198
      %p200 = scmp.ne.s32.totalorder %s188, %s189
      %p201 = scmp.eq.s32.totalorder %s27, 1
      %p202 = por %p200, %p201
      %p204 = scmp.ne.s32.totalorder %s189, %s203
      %p205 = scmp.eq.s32.totalorder %s27, 0
      %p206 = por %p204, %p205
      %s208 = sadd.s32 %s207, 1
      %p211 = scmp.eq.s32.totalorder %s21, 1
      %p212 = scmp.ne.s32.totalorder %s207, %s209
      %p213 = scmp.eq.s32.totalorder %s21, 0
      %p214 = por %p212, %p213
      %p215 = scmp.ne.s32.totalorder %s207, %s209
      %p216 = scmp.eq.s32.totalorder %s26, 1
      %p217 = por %p215, %p216
      %p218 = scmp.ne.s32.totalorder %s209, %s210
      %p219 = scmp.eq.s32.totalorder %s26, 0
      %p220 = por %p218, %p219
      %p221 = scmp.ne.s32.totalorder %s209, %s210
      %p222 = scmp.eq.s32.totalorder %s27, 1
      %p223 = por %p221, %p222
      %p225 = scmp.ne.s32.totalorder %s210, %s224
      %p226 = scmp.eq.s32.totalorder %s27, 0
      %p227 = por %p225, %p226
      %s229 = sadd.s32 %s228, 1
      %p232 = scmp.eq.s32.totalorder %s21, 1
      %p233 = scmp.ne.s32.totalorder %s228, %s230
      %p234 = scmp.eq.s32.totalorder %s21, 0
      %p235 = por %p233, %p234
      %p236 = scmp.ne.s32.totalorder %s228, %s230
      %p237 = scmp.eq.s32.totalorder %s26, 1
      %p238 = por %p236, %p237
      %p239 = scmp.ne.s32.totalorder %s230, %s231
      %p240 = scmp.eq.s32.totalorder %s26, 0
      %p241 = por %p239, %p240
      %p242 = scmp.ne.s32.totalorder %s230, %s231
      %p243 = scmp.eq.s32.totalorder %s27, 1
      %p244 = por %p242, %p243
      %p246 = scmp.ne.s32.totalorder %s231, %s245
      %p247 = scmp.eq.s32.totalorder %s27, 0
      %p248 = por %p246, %p247
      %s250 = sadd.s32 %s249, 1
      %p253 = scmp.eq.s32.totalorder %s21, 1
      %p254 = scmp.ne.s32.totalorder %s249, %s251
      %p255 = scmp.eq.s32.totalorder %s21, 0
      %p256 = por %p254, %p255
      %p257 = scmp.ne.s32.totalorder %s249, %s251
      %p258 = scmp.eq.s32.totalorder %s26, 1
      %p259 = por %p257, %p258
      %p260 = scmp.ne.s32.totalorder %s251, %s252
      %p261 = scmp.eq.s32.totalorder %s26, 0
      %p262 = por %p260, %p261
      %p263 = scmp.ne.s32.totalorder %s251, %s252
      %p264 = scmp.eq.s32.totalorder %s27, 1
      %p265 = por %p263, %p264
      %p267 = scmp.ne.s32.totalorder %s252, %s266
      %p268 = scmp.eq.s32.totalorder %s27, 0
      %p269 = por %p267, %p268
      %s271 = sadd.s32 %s270, 1
      %p274 = scmp.eq.s32.totalorder %s21, 1
      %p275 = scmp.ne.s32.totalorder %s270, %s272
      %p276 = scmp.eq.s32.totalorder %s21, 0
      %p277 = por %p275, %p276
      %p278 = scmp.ne.s32.totalorder %s270, %s272
      %p279 = scmp.eq.s32.totalorder %s26, 1
      %p280 = por %p278, %p279
      %p281 = scmp.ne.s32.totalorder %s272, %s273
      %p282 = scmp.eq.s32.totalorder %s26, 0
      %p283 = por %p281, %p282
      %p284 = scmp.ne.s32.totalorder %s272, %s273
      %p285 = scmp.eq.s32.totalorder %s27, 1
      %p286 = por %p284, %p285
      %p288 = scmp.ne.s32.totalorder %s273, %s287
      %p289 = scmp.eq.s32.totalorder %s27, 0
      %p290 = por %p288, %p289
      %s291 = ssub.s32 %s21, %s28
      %p292 = scmp.eq.s32.totalorder %s291, 0
      %s294 = sadd.s32 %s293, 1
      %s295 = scalar_select %p292, %s293, %s294
      %p298 = pneg %p292
      %p299 = scmp.eq.s32.totalorder %s21, 1
      %p300 = por %p298, %p299
      %p301 = scmp.ne.s32.totalorder %s293, %s296
      %p302 = scmp.eq.s32.totalorder %s21, 0
      %p303 = por %p301, %p302
      %p304 = scmp.ne.s32.totalorder %s293, %s296
      %p305 = scmp.eq.s32.totalorder %s26, 1
      %p306 = por %p304, %p305
      %p307 = scmp.ne.s32.totalorder %s296, %s297
      %p308 = scmp.eq.s32.totalorder %s26, 0
      %p309 = por %p307, %p308
      %p310 = scmp.ne.s32.totalorder %s296, %s297
      %p311 = scmp.eq.s32.totalorder %s27, 1
      %p312 = por %p310, %p311
      %p314 = scmp.ne.s32.totalorder %s297, %s313
      %p315 = scmp.eq.s32.totalorder %s27, 0
      %p316 = por %p314, %p315
      %p317 = scmp.le.s32.totalorder 1, %s21
      %p318 = scmp.lt.s32.totalorder %s21, 3
      %p319 = pnand %p317, %p318
      %p320 = pneg %p319
      // Predicated region
      $region9: #{_lambda_.1} parent=5 // pred_check
        _
      $region10: #{_lambda_.1} parent=5 // pred_check_branch
        %322 = sbr.rel (%p319) target = $region12
      $region11: #{_lambda_.1} parent=5 // pred_region
        %s323 = ssub.s32 %s21, 1
        // Predicated region
        $region13: #{_lambda_.1} parent=11 // pred_check
          %p324 = pneg %p94
        $region14: #{_lambda_.1} parent=11 // pred_check_branch
          %326 = sbr.rel (%p324) target = $region16
        $region15: #{_lambda_.1} parent=11 // pred_region
          _
        $region16: #{_lambda_.1} parent=11 // pred_fallthru
          _
        // Predicated region
        $region17: #{_lambda_.1} parent=11 // pred_check
          %p327 = pneg %p115
        $region18: #{_lambda_.1} parent=11 // pred_check_branch
          %329 = sbr.rel (%p327) target = $region20
        $region19: #{_lambda_.1} parent=11 // pred_region
          _
        $region20: #{_lambda_.1} parent=11 // pred_fallthru
          _
        // Predicated region
        $region21: #{_lambda_.1} parent=11 // pred_check
          %p330 = pneg %p136
        $region22: #{_lambda_.1} parent=11 // pred_check_branch
          %332 = sbr.rel (%p330) target = $region24
        $region23: #{_lambda_.1} parent=11 // pred_region
          _
        $region24: #{_lambda_.1} parent=11 // pred_fallthru
          _
        // Predicated region
        $region25: #{_lambda_.1} parent=11 // pred_check
          %p333 = pneg %p157
        $region26: #{_lambda_.1} parent=11 // pred_check_branch
          %335 = sbr.rel (%p333) target = $region28
        $region27: #{_lambda_.1} parent=11 // pred_region
          _
        $region28: #{_lambda_.1} parent=11 // pred_fallthru
          _
        // Predicated region
        $region29: #{_lambda_.1} parent=11 // pred_check
          %p336 = pneg %p178
        $region30: #{_lambda_.1} parent=11 // pred_check_branch
          %338 = sbr.rel (%p336) target = $region32
        $region31: #{_lambda_.1} parent=11 // pred_region
          _
        $region32: #{_lambda_.1} parent=11 // pred_fallthru
          _
        // Predicated region
        $region33: #{_lambda_.1} parent=11 // pred_check
          %p339 = pneg %p199
        $region34: #{_lambda_.1} parent=11 // pred_check_branch
          %341 = sbr.rel (%p339) target = $region36
        $region35: #{_lambda_.1} parent=11 // pred_region
          _
        $region36: #{_lambda_.1} parent=11 // pred_fallthru
          _
        // Predicated region
        $region37: #{_lambda_.1} parent=11 // pred_check
          %p342 = pneg %p220
        $region38: #{_lambda_.1} parent=11 // pred_check_branch
          %344 = sbr.rel (%p342) target = $region40
        $region39: #{_lambda_.1} parent=11 // pred_region
          _
        $region40: #{_lambda_.1} parent=11 // pred_fallthru
          _
        // Predicated region
        $region41: #{_lambda_.1} parent=11 // pred_check
          %p345 = pneg %p241
        $region42: #{_lambda_.1} parent=11 // pred_check_branch
          %347 = sbr.rel (%p345) target = $region44
        $region43: #{_lambda_.1} parent=11 // pred_region
          _
        $region44: #{_lambda_.1} parent=11 // pred_fallthru
          _
        // Predicated region
        $region45: #{_lambda_.1} parent=11 // pred_check
          %p348 = pneg %p262
        $region46: #{_lambda_.1} parent=11 // pred_check_branch
          %350 = sbr.rel (%p348) target = $region48
        $region47: #{_lambda_.1} parent=11 // pred_region
          _
        $region48: #{_lambda_.1} parent=11 // pred_fallthru
          _
        // Predicated region
        $region49: #{_lambda_.1} parent=11 // pred_check
          %p351 = pneg %p283
        $region50: #{_lambda_.1} parent=11 // pred_check_branch
          %353 = sbr.rel (%p351) target = $region52
        $region51: #{_lambda_.1} parent=11 // pred_region
          _
        $region52: #{_lambda_.1} parent=11 // pred_fallthru
          _
      $region12: #{_lambda_.1} parent=5 // pred_fallthru
        _
      %p354 = scmp.lt.s32.totalorder %s21, 2
      // Predicated region
      $region53: #{_lambda_.1} parent=5 // pred_check
        %p355 = pneg %p354
      $region54: #{_lambda_.1} parent=5 // pred_check_branch
        %357 = sbr.rel (%p355) target = $region56
      $region55: #{_lambda_.1} parent=5 // pred_region
        // Predicated region
        $region57: #{_lambda_.1} parent=55 // pred_check
          %p358 = pneg %p41
        $region58: #{_lambda_.1} parent=55 // pred_check_branch
          %360 = sbr.rel (%p358) target = $region60
        $region59: #{_lambda_.1} parent=55 // pred_region
          %p361 = scmp.lt.s32.totalorder %s21, 1
          %s362 = scalar_select %p361, %s21, 1
          %s363 = smul.addr %s362, 9
          %s364 = smul.addr %s363, 4
          %s365 = scalar_lea.vmem %s0, %s364
        $region60: #{_lambda_.1} parent=55 // pred_fallthru
          _
        // Predicated region
        $region61: #{_lambda_.1} parent=55 // pred_check
          %p366 = pneg %p67
        $region62: #{_lambda_.1} parent=55 // pred_check_branch
          %368 = sbr.rel (%p366) target = $region64
        $region63: #{_lambda_.1} parent=55 // pred_region
          %p369 = scmp.lt.s32.totalorder %s21, 1
          %s370 = scalar_select %p369, %s21, 1
          %s371 = smul.addr %s370, 9
          %s372 = smul.addr %s371, 4
          %s373 = scalar_lea.vmem %s1, %s372
        $region64: #{_lambda_.1} parent=55 // pred_fallthru
          _
      $region56: #{_lambda_.1} parent=5 // pred_fallthru
        _
      %p374 = scmp.le.s32.totalorder 1, %s21
      %p375 = scmp.lt.s32.totalorder %s21, 3
      %p376 = pnand %p374, %p375
      %p377 = pneg %p376
      // Predicated region
      $region65: #{_lambda_.1} parent=5 // pred_check
        _
      $region66: #{_lambda_.1} parent=5 // pred_check_branch
        %379 = sbr.rel (%p376) target = $region68
      $region67: #{_lambda_.1} parent=5 // pred_region
        %s380 = ssub.s32 %s21, 1
        %p381 = scmp.lt.s32.totalorder %s26, 1
        %s382 = scalar_select %p381, %s26, 1
        %s383 = smul.addr %s382, 9
        %s384 = smul.addr %s383, 4
        %s385 = scalar_lea.vmem %s0, %s384
        %p386 = pneg %p47
        %p387 = pneg %p44
        %p388 = scmp.lt.s32.totalorder %s26, 1
        %s389 = scalar_select %p388, %s26, 1
        %s390 = smul.addr %s389, 9
        %s391 = smul.addr %s390, 4
        %s392 = scalar_lea.vmem %s1, %s391
        %p393 = pneg %p73
        %p394 = pneg %p70
        %p395 = pneg %p94
        %p396 = pneg %p91
        %p397 = pneg %p115
        %p398 = pneg %p112
        %p399 = pneg %p136
        %p400 = pneg %p133
        %p401 = pneg %p157
        %p402 = pneg %p154
        %p403 = pneg %p178
        %p404 = pneg %p175
        %p405 = pneg %p199
        %p406 = pneg %p196
        %p407 = pneg %p220
        %p408 = pneg %p217
        %p409 = pneg %p241
        %p410 = pneg %p238
        %p411 = pneg %p262
        %p412 = pneg %p259
        %p413 = pneg %p283
        %p414 = pneg %p280
        %p415 = pneg %p309
        %p416 = pneg %p306
        %s417 = sand.u32 %s296, 1
        %s418 = scalar_lea.sflag [#allocation3], %s417
        %s419 = sand.u32 %s296, 1
        %s420 = scalar_lea.vmem [#allocation2], %s419
        %p421 = scmp.lt.s32.totalorder %s26, 1
        %s422 = scalar_select %p421, %s26, 1
        %s423 = smul.addr %s422, 9
        %s424 = smul.addr %s423, 4
        %s425 = scalar_lea.vmem %s0, %s424
        %p426 = scmp.lt.s32.totalorder %s26, 1
        %s427 = scalar_select %p426, %s26, 1
        %s428 = smul.addr %s427, 9
        %s429 = smul.addr %s428, 4
        %s430 = scalar_lea.vmem %s1, %s429
        %v432 = vld [vmem:[%s430] sm:$0xf]
        %v433 = vld [vmem:[%s430 + $0x4] sm:$0xf]
        %v434 = vld [vmem:[%s430 + $0x8] sm:$0xf]
        %v435 = vld [vmem:[%s430 + $0xc] sm:$0xf]
        %v436 = vld [vmem:[%s430 + $0x10] sm:$0xf]
        %v437 = vld [vmem:[%s430 + $0x14] sm:$0xf]
        %v438 = vld [vmem:[%s430 + $0x18] sm:$0xf]
        %v439 = vld [vmem:[%s430 + $0x1c] sm:$0xf]
        %v440 = vld [vmem:[%s430 + $0x20] sm:$0x1]
        %v441 = vld [vmem:[%s425] sm:$0xf]
        %v442 = vld [vmem:[%s425 + $0x4] sm:$0xf]
        %v443 = vld [vmem:[%s425 + $0x8] sm:$0xf]
        %v444 = vld [vmem:[%s425 + $0xc] sm:$0xf]
        %v445 = vld [vmem:[%s425 + $0x10] sm:$0xf]
        %v446 = vld [vmem:[%s425 + $0x14] sm:$0xf]
        %v447 = vld [vmem:[%s425 + $0x18] sm:$0xf]
        %v448 = vld [vmem:[%s425 + $0x1c] sm:$0xf]
        %v449 = vld [vmem:[%s425 + $0x20] sm:$0x1]
        %v450 = vld [vmem:[%s2] sm:$0xf]
        %v451 = vld [vmem:[%s2 + $0x4] sm:$0xf]
        %v452 = vld [vmem:[%s2 + $0x8] sm:$0xf]
        %v462 = vunpack.c.l.b16 %v441
        %v463 = vunpack.c.l.b16 %v442
        %v464 = vunpack.c.l.b16 %v443
        %v465 = vunpack.c.l.b16 %v444
        %v466 = vunpack.c.l.b16 %v445
        %v467 = vunpack.c.l.b16 %v446
        %v468 = vunpack.c.l.b16 %v447
        %v469 = vunpack.c.l.b16 %v448
        %v470 = vunpack.c.l.b16 %v449
        %v471 = vpack.c.b16 %v463, %v462
        %v472 = vpack.c.b16 %v465, %v464
        %v473 = vpack.c.b16 %v467, %v466
        %v474 = vpack.c.b16 %v469, %v468
        %v475 = vpack.c.b16 %v470, %v470
        %v479 = vunpack.c.l.b16 %v450
        %v480 = vunpack.c.l.b16 %v451
        %v481 = vunpack.c.l.b16 %v452
        %v482 = vpack.c.b16 %v480, %v479
        %v483 = vpack.c.b16 %v481, %v481
        %vm485 = vcmask 195584
        %v487 = vsel %vm485, %v471, 0
        %v490 = vsel %vm485, %v472, 0
        %v493 = vsel %vm485, %v473, 0
        %v496 = vsel %vm485, %v474, 0
        %v499 = vsel %vm485, %v475, 0
        %vm501 = vcmask 1043456
        %v503 = vsel %vm501, %v483, 0
        %505 = vmatprep.subr.bf16.mxu0 0
        %506 = vmatpush1.bf16.msra.mxu0 %v482
        %507 = vmatprep.subr.bf16.mxu0 0
        %508 = vmatpush1.bf16.msra.mxu0 %v503
        %509 = vmatprep.subr.bf16.mxu0 0
        %510 = vmatpush1.bf16.msra.mxu0 0
        %511 = vmatprep.subr.bf16.mxu0 0
        %512 = vmatpush1.bf16.msra.mxu0 0
        %513 = vmatprep.subr.bf16.mxu0 0
        %514 = vmatpush1.bf16.msra.mxu0 0
        %515 = vmatprep.subr.bf16.mxu0 0
        %516 = vmatpush1.bf16.msra.mxu0 0
        %517 = vmatprep.subr.bf16.mxu0 0
        %518 = vmatpush1.bf16.msra.mxu0 0
        %519 = vmatprep.subr.bf16.mxu0 0
        %520 = vmatpush1.bf16.msra.mxu0 0
        %521 = vmatprep.subr.bf16.mxu0 0
        %522 = vmatpush1.bf16.msra.mxu0 0
        %523 = vmatprep.subr.bf16.mxu0 0
        %524 = vmatpush1.bf16.msra.mxu0 0
        %525 = vmatprep.subr.bf16.mxu0 0
        %526 = vmatpush1.bf16.msra.mxu0 0
        %527 = vmatprep.subr.bf16.mxu0 0
        %528 = vmatpush1.bf16.msra.mxu0 0
        %529 = vmatprep.subr.bf16.mxu0 0
        %530 = vmatpush1.bf16.msra.mxu0 0
        %531 = vmatprep.subr.bf16.mxu0 0
        %532 = vmatpush1.bf16.msra.mxu0 0
        %533 = vmatprep.subr.bf16.mxu0 0
        %534 = vmatpush1.bf16.msra.mxu0 0
        %535 = vmatprep.subr.bf16.mxu0 0
        %536 = vmatpush1.bf16.msra.mxu0 0
        %537 = vmatprep.mubr.bf16.mxu0 0
        %538 = vmatmul.mubr.bf16.gmra.mrb[0].mxu0 %v487
        %v539 = vpop.f32.mrb[0].mxu0
        %v540 = vadd.f32 0.0, %v539
        %v541 = vpop.f32.mrb[0].mxu0
        %v542 = vpop.f32.mrb[0].mxu0
        %v543 = vadd.f32 0.0, %v542
        %v544 = vpop.f32.mrb[0].mxu0
        %545 = vmatprep.mubr.bf16.mxu0 0
        %546 = vmatmul.mubr.bf16.gmra.mrb[0].mxu0 %v490
        %v547 = vpop.f32.mrb[0].mxu0
        %v548 = vadd.f32 0.0, %v547
        %v549 = vpop.f32.mrb[0].mxu0
        %v550 = vpop.f32.mrb[0].mxu0
        %v551 = vadd.f32 0.0, %v550
        %v552 = vpop.f32.mrb[0].mxu0
        %553 = vmatprep.mubr.bf16.mxu0 0
        %554 = vmatmul.mubr.bf16.gmra.mrb[0].mxu0 %v493
        %v555 = vpop.f32.mrb[0].mxu0
        %v556 = vadd.f32 0.0, %v555
        %v557 = vpop.f32.mrb[0].mxu0
        %v558 = vpop.f32.mrb[0].mxu0
        %v559 = vadd.f32 0.0, %v558
        %v560 = vpop.f32.mrb[0].mxu0
        %561 = vmatprep.mubr.bf16.mxu0 0
        %562 = vmatmul.mubr.bf16.gmra.mrb[0].mxu0 %v496
        %v563 = vpop.f32.mrb[0].mxu0
        %v564 = vadd.f32 0.0, %v563
        %v565 = vpop.f32.mrb[0].mxu0
        %v566 = vpop.f32.mrb[0].mxu0
        %v567 = vadd.f32 0.0, %v566
        %v568 = vpop.f32.mrb[0].mxu0
        %569 = vmatprep.mubr.bf16.mxu0 0
        %570 = vmatmul.mubr.bf16.gmra.mrb[0].mxu0 %v499
        %v571 = vpop.f32.mrb[0].mxu0
        %v572 = vadd.f32 0.0, %v571
        %v573 = vpop.f32.mrb[0].mxu0
        %v574 = vpop.f32.mrb[0].mxu0
        %v575 = vpop.f32.mrb[0].mxu0
        %576 = vdwg.mxu0
        %v577 = vpack.c.bf16 %v543, %v540
        %v578 = vpack.c.bf16 %v551, %v548
        %v579 = vpack.c.bf16 %v559, %v556
        %v580 = vpack.c.bf16 %v567, %v564
        %v581 = vpack.c.bf16 %v572, %v572
        %v582 = vld [vmem:[%s3] sm:$0x1]
        %v584 = vlaneseq
        %v585 = vshrl.u32 %v584, 7
        %v586 = vsub.s32 0, %v585
        %v587 = vrot.slane %v582, %v586
        %v598 = vunpack.c.l.b16 %v432
        %v599 = vunpack.c.l.b16 %v433
        %v600 = vunpack.c.l.b16 %v434
        %v601 = vunpack.c.l.b16 %v435
        %v602 = vunpack.c.l.b16 %v436
        %v603 = vunpack.c.l.b16 %v437
        %v604 = vunpack.c.l.b16 %v438
        %v605 = vunpack.c.l.b16 %v439
        %v606 = vunpack.c.l.b16 %v440
        %v607 = vpack.c.b16 %v599, %v598
        %v608 = vpack.c.b16 %v601, %v600
        %v609 = vpack.c.b16 %v603, %v602
        %v610 = vpack.c.b16 %v605, %v604
        %v611 = vpack.c.b16 %v606, %v606
        %vm612 = vcmask 539648
        %v614 = vsel %vm612, %v607, 0
        %v617 = vsel %vm612, %v608, 0
        %v620 = vsel %vm612, %v609, 0
        %v623 = vsel %vm612, %v610, 0
        %v626 = vsel %vm612, %v611, 0
        %vm628 = vcmask 1040384
        %v630 = vsel %vm628, %v581, 0
        %632 = vmatprep.subr.bf16.mxu0 0
        %633 = vmatpush1.bf16.msra.mxu0 %v577
        %634 = vmatprep.subr.bf16.mxu0 0
        %635 = vmatpush1.bf16.msra.mxu0 %v578
        %636 = vmatprep.subr.bf16.mxu0 0
        %637 = vmatpush1.bf16.msra.mxu0 %v579
        %638 = vmatprep.subr.bf16.mxu0 0
        %639 = vmatpush1.bf16.msra.mxu0 %v580
        %640 = vmatprep.subr.bf16.mxu0 0
        %641 = vmatpush1.bf16.msra.mxu0 %v630
        %642 = vmatprep.subr.bf16.mxu0 0
        %643 = vmatpush1.bf16.msra.mxu0 0
        %644 = vmatprep.subr.bf16.mxu0 0
        %645 = vmatpush1.bf16.msra.mxu0 0
        %646 = vmatprep.subr.bf16.mxu0 0
        %647 = vmatpush1.bf16.msra.mxu0 0
        %648 = vmatprep.subr.bf16.mxu0 0
        %649 = vmatpush1.bf16.msra.mxu0 0
        %650 = vmatprep.subr.bf16.mxu0 0
        %651 = vmatpush1.bf16.msra.mxu0 0
        %652 = vmatprep.subr.bf16.mxu0 0
        %653 = vmatpush1.bf16.msra.mxu0 0
        %654 = vmatprep.subr.bf16.mxu0 0
        %655 = vmatpush1.bf16.msra.mxu0 0
        %656 = vmatprep.subr.bf16.mxu0 0
        %657 = vmatpush1.bf16.msra.mxu0 0
        %658 = vmatprep.subr.bf16.mxu0 0
        %659 = vmatpush1.bf16.msra.mxu0 0
        %660 = vmatprep.subr.bf16.mxu0 0
        %661 = vmatpush1.bf16.msra.mxu0 0
        %662 = vmatprep.subr.bf16.mxu0 0
        %663 = vmatpush1.bf16.msra.mxu0 0
        %664 = vmatprep.mubr.bf16.mxu0 0
        %665 = vmatmul.mubr.bf16.gmra.mrb[0].mxu0 %v614
        %v666 = vpop.f32.mrb[0].mxu0
        %v667 = vadd.f32 %v587, %v666
        %v668 = vpop.f32.mrb[0].mxu0
        %v669 = vpop.f32.mrb[0].mxu0
        %v670 = vadd.f32 %v587, %v669
        %v671 = vpop.f32.mrb[0].mxu0
        %672 = vmatprep.mubr.bf16.mxu0 0
        %673 = vmatmul.mubr.bf16.gmra.mrb[0].mxu0 %v617
        %v674 = vpop.f32.mrb[0].mxu0
        %v675 = vadd.f32 %v587, %v674
        %v676 = vpop.f32.mrb[0].mxu0
        %v677 = vpop.f32.mrb[0].mxu0
        %v678 = vadd.f32 %v587, %v677
        %v679 = vpop.f32.mrb[0].mxu0
        %680 = vmatprep.mubr.bf16.mxu0 0
        %681 = vmatmul.mubr.bf16.gmra.mrb[0].mxu0 %v620
        %v682 = vpop.f32.mrb[0].mxu0
        %v683 = vadd.f32 %v587, %v682
        %v684 = vpop.f32.mrb[0].mxu0
        %v685 = vpop.f32.mrb[0].mxu0
        %v686 = vadd.f32 %v587, %v685
        %v687 = vpop.f32.mrb[0].mxu0
        %688 = vmatprep.mubr.bf16.mxu0 0
        %689 = vmatmul.mubr.bf16.gmra.mrb[0].mxu0 %v623
        %v690 = vpop.f32.mrb[0].mxu0
        %v691 = vadd.f32 %v587, %v690
        %v692 = vpop.f32.mrb[0].mxu0
        %v693 = vpop.f32.mrb[0].mxu0
        %v694 = vadd.f32 %v587, %v693
        %v695 = vpop.f32.mrb[0].mxu0
        %696 = vmatprep.mubr.bf16.mxu0 0
        %697 = vmatmul.mubr.bf16.gmra.mrb[0].mxu0 %v626
        %v698 = vpop.f32.mrb[0].mxu0
        %v699 = vadd.f32 %v587, %v698
        %v700 = vpop.f32.mrb[0].mxu0
        %v701 = vpop.f32.mrb[0].mxu0
        %v702 = vpop.f32.mrb[0].mxu0
        %703 = vdwg.mxu0
        %v704 = vmax.f32 %v667, 0.0
        %v705 = vmax.f32 %v670, 0.0
        %v706 = vmax.f32 %v675, 0.0
        %v707 = vmax.f32 %v678, 0.0
        %v708 = vmax.f32 %v683, 0.0
        %v709 = vmax.f32 %v686, 0.0
        %v710 = vmax.f32 %v691, 0.0
        %v711 = vmax.f32 %v694, 0.0
        %v712 = vmax.f32 %v699, 0.0
        %v713 = vpack.c.bf16 %v705, %v704
        %v714 = vpack.c.bf16 %v707, %v706
        %v715 = vpack.c.bf16 %v709, %v708
        %v716 = vpack.c.bf16 %v711, %v710
        %v717 = vpack.c.bf16 %v712, %v712
        %v718 = vld [vmem:[%s4] sm:$0xf]
        %v719 = vld [vmem:[%s4 + $0x4] sm:$0xf]
        %v720 = vld [vmem:[%s4 + $0x8] sm:$0xf]
        %v721 = vld [vmem:[%s4 + $0xc] sm:$0xf]
        %v726 = vunpack.c.l.b16 %v718
        %v727 = vunpack.c.l.b16 %v719
        %v728 = vunpack.c.l.b16 %v720
        %v729 = vunpack.c.l.b16 %v721
        %v730 = vpack.c.b16 %v727, %v726
        %v731 = vpack.c.b16 %v729, %v728
        %vm734 = vcmask 261120
        %v736 = vsel %vm734, %v713, 0
        %v739 = vsel %vm734, %v714, 0
        %v742 = vsel %vm734, %v715, 0
        %v745 = vsel %vm734, %v716, 0
        %v748 = vsel %vm734, %v717, 0
        %750 = vmatprep.subr.bf16.mxu0 0
        %751 = vmatpush1.bf16.msra.mxu0 %v730
        %752 = vmatprep.subr.bf16.mxu0 0
        %753 = vmatpush1.bf16.msra.mxu0 %v731
        %754 = vmatprep.subr.bf16.mxu0 0
        %755 = vmatpush1.bf16.msra.mxu0 0
        %756 = vmatprep.subr.bf16.mxu0 0
        %757 = vmatpush1.bf16.msra.mxu0 0
        %758 = vmatprep.subr.bf16.mxu0 0
        %759 = vmatpush1.bf16.msra.mxu0 0
        %760 = vmatprep.subr.bf16.mxu0 0
        %761 = vmatpush1.bf16.msra.mxu0 0
        %762 = vmatprep.subr.bf16.mxu0 0
        %763 = vmatpush1.bf16.msra.mxu0 0
        %764 = vmatprep.subr.bf16.mxu0 0
        %765 = vmatpush1.bf16.msra.mxu0 0
        %766 = vmatprep.subr.bf16.mxu0 0
        %767 = vmatpush1.bf16.msra.mxu0 0
        %768 = vmatprep.subr.bf16.mxu0 0
        %769 = vmatpush1.bf16.msra.mxu0 0
        %770 = vmatprep.subr.bf16.mxu0 0
        %771 = vmatpush1.bf16.msra.mxu0 0
        %772 = vmatprep.subr.bf16.mxu0 0
        %773 = vmatpush1.bf16.msra.mxu0 0
        %774 = vmatprep.subr.bf16.mxu0 0
        %775 = vmatpush1.bf16.msra.mxu0 0
        %776 = vmatprep.subr.bf16.mxu0 0
        %777 = vmatpush1.bf16.msra.mxu0 0
        %778 = vmatprep.subr.bf16.mxu0 0
        %779 = vmatpush1.bf16.msra.mxu0 0
        %780 = vmatprep.subr.bf16.mxu0 0
        %781 = vmatpush1.bf16.msra.mxu0 0
        %782 = vmatprep.mubr.bf16.mxu0 0
        %783 = vmatmul.mubr.bf16.gmra.mrb[0].mxu0 %v736
        %v784 = vpop.f32.mrb[0].mxu0
        %v785 = vadd.f32 0.0, %v784
        %v786 = vpop.f32.mrb[0].mxu0
        %v787 = vpop.f32.mrb[0].mxu0
        %v788 = vadd.f32 0.0, %v787
        %v789 = vpop.f32.mrb[0].mxu0
        %790 = vmatprep.mubr.bf16.mxu0 0
        %791 = vmatmul.mubr.bf16.gmra.mrb[0].mxu0 %v739
        %v792 = vpop.f32.mrb[0].mxu0
        %v793 = vadd.f32 0.0, %v792
        %v794 = vpop.f32.mrb[0].mxu0
        %v795 = vpop.f32.mrb[0].mxu0
        %v796 = vadd.f32 0.0, %v795
        %v797 = vpop.f32.mrb[0].mxu0
        %798 = vmatprep.mubr.bf16.mxu0 0
        %799 = vmatmul.mubr.bf16.gmra.mrb[0].mxu0 %v742
        %v800 = vpop.f32.mrb[0].mxu0
        %v801 = vadd.f32 0.0, %v800
        %v802 = vpop.f32.mrb[0].mxu0
        %v803 = vpop.f32.mrb[0].mxu0
        %v804 = vadd.f32 0.0, %v803
        %v805 = vpop.f32.mrb[0].mxu0
        %806 = vmatprep.mubr.bf16.mxu0 0
        %807 = vmatmul.mubr.bf16.gmra.mrb[0].mxu0 %v745
        %v808 = vpop.f32.mrb[0].mxu0
        %v809 = vadd.f32 0.0, %v808
        %v810 = vpop.f32.mrb[0].mxu0
        %v811 = vpop.f32.mrb[0].mxu0
        %v812 = vadd.f32 0.0, %v811
        %v813 = vpop.f32.mrb[0].mxu0
        %814 = vmatprep.mubr.bf16.mxu0 0
        %815 = vmatmul.mubr.bf16.gmra.mrb[0].mxu0 %v748
        %v816 = vpop.f32.mrb[0].mxu0
        %v817 = vadd.f32 0.0, %v816
        %v818 = vpop.f32.mrb[0].mxu0
        %v819 = vpop.f32.mrb[0].mxu0
        %v820 = vpop.f32.mrb[0].mxu0
        %821 = vdwg.mxu0
        %v822 = vpack.c.bf16 %v788, %v785
        %v823 = vpack.c.bf16 %v796, %v793
        %v824 = vpack.c.bf16 %v804, %v801
        %v825 = vpack.c.bf16 %v812, %v809
        %v826 = vpack.c.bf16 %v817, %v817
        %v827 = vld [vmem:[%s5] sm:$0x1]
        %v829 = vlaneseq
        %v830 = vshrl.u32 %v829, 7
        %v831 = vsub.s32 0, %v830
        %v832 = vrot.slane %v827, %v831
        %v835 = vsel %vm628, %v826, 0
        %837 = vmatprep.subr.bf16.mxu0 0
        %838 = vmatpush1.bf16.msra.mxu0 %v822
        %839 = vmatprep.subr.bf16.mxu0 0
        %840 = vmatpush1.bf16.msra.mxu0 %v823
        %841 = vmatprep.subr.bf16.mxu0 0
        %842 = vmatpush1.bf16.msra.mxu0 %v824
        %843 = vmatprep.subr.bf16.mxu0 0
        %844 = vmatpush1.bf16.msra.mxu0 %v825
        %845 = vmatprep.subr.bf16.mxu0 0
        %846 = vmatpush1.bf16.msra.mxu0 %v835
        %847 = vmatprep.subr.bf16.mxu0 0
        %848 = vmatpush1.bf16.msra.mxu0 0
        %849 = vmatprep.subr.bf16.mxu0 0
        %850 = vmatpush1.bf16.msra.mxu0 0
        %851 = vmatprep.subr.bf16.mxu0 0
        %852 = vmatpush1.bf16.msra.mxu0 0
        %853 = vmatprep.subr.bf16.mxu0 0
        %854 = vmatpush1.bf16.msra.mxu0 0
        %855 = vmatprep.subr.bf16.mxu0 0
        %856 = vmatpush1.bf16.msra.mxu0 0
        %857 = vmatprep.subr.bf16.mxu0 0
        %858 = vmatpush1.bf16.msra.mxu0 0
        %859 = vmatprep.subr.bf16.mxu0 0
        %860 = vmatpush1.bf16.msra.mxu0 0
        %861 = vmatprep.subr.bf16.mxu0 0
        %862 = vmatpush1.bf16.msra.mxu0 0
        %863 = vmatprep.subr.bf16.mxu0 0
        %864 = vmatpush1.bf16.msra.mxu0 0
        %865 = vmatprep.subr.bf16.mxu0 0
        %866 = vmatpush1.bf16.msra.mxu0 0
        %867 = vmatprep.subr.bf16.mxu0 0
        %868 = vmatpush1.bf16.msra.mxu0 0
        %869 = vmatprep.mubr.bf16.mxu0 0
        %870 = vmatmul.mubr.bf16.gmra.mrb[0].mxu0 %v614
        %v871 = vpop.f32.mrb[0].mxu0
        %v872 = vadd.f32 %v832, %v871
        %v873 = vpop.f32.mrb[0].mxu0
        %v874 = vpop.f32.mrb[0].mxu0
        %v875 = vadd.f32 %v832, %v874
        %v876 = vpop.f32.mrb[0].mxu0
        %877 = vmatprep.mubr.bf16.mxu0 0
        %878 = vmatmul.mubr.bf16.gmra.mrb[0].mxu0 %v617
        %v879 = vpop.f32.mrb[0].mxu0
        %v880 = vadd.f32 %v832, %v879
        %v881 = vpop.f32.mrb[0].mxu0
        %v882 = vpop.f32.mrb[0].mxu0
        %v883 = vadd.f32 %v832, %v882
        %v884 = vpop.f32.mrb[0].mxu0
        %885 = vmatprep.mubr.bf16.mxu0 0
        %886 = vmatmul.mubr.bf16.gmra.mrb[0].mxu0 %v620
        %v887 = vpop.f32.mrb[0].mxu0
        %v888 = vadd.f32 %v832, %v887
        %v889 = vpop.f32.mrb[0].mxu0
        %v890 = vpop.f32.mrb[0].mxu0
        %v891 = vadd.f32 %v832, %v890
        %v892 = vpop.f32.mrb[0].mxu0
        %893 = vmatprep.mubr.bf16.mxu0 0
        %894 = vmatmul.mubr.bf16.gmra.mrb[0].mxu0 %v623
        %v895 = vpop.f32.mrb[0].mxu0
        %v896 = vadd.f32 %v832, %v895
        %v897 = vpop.f32.mrb[0].mxu0
        %v898 = vpop.f32.mrb[0].mxu0
        %v899 = vadd.f32 %v832, %v898
        %v900 = vpop.f32.mrb[0].mxu0
        %901 = vmatprep.mubr.bf16.mxu0 0
        %902 = vmatmul.mubr.bf16.gmra.mrb[0].mxu0 %v626
        %v903 = vpop.f32.mrb[0].mxu0
        %v904 = vadd.f32 %v832, %v903
        %v905 = vpop.f32.mrb[0].mxu0
        %v906 = vpop.f32.mrb[0].mxu0
        %v907 = vpop.f32.mrb[0].mxu0
        %908 = vdwg.mxu0
        %v909 = vmax.f32 %v872, 0.0
        %v910 = vmax.f32 %v875, 0.0
        %v911 = vmax.f32 %v880, 0.0
        %v912 = vmax.f32 %v883, 0.0
        %v913 = vmax.f32 %v888, 0.0
        %v914 = vmax.f32 %v891, 0.0
        %v915 = vmax.f32 %v896, 0.0
        %v916 = vmax.f32 %v899, 0.0
        %v917 = vmax.f32 %v904, 0.0
        %v918 = vpack.c.bf16 %v910, %v909
        %v919 = vpack.c.bf16 %v912, %v911
        %v920 = vpack.c.bf16 %v914, %v913
        %v921 = vpack.c.bf16 %v916, %v915
        %v922 = vpack.c.bf16 %v917, %v917
        %v923 = vld [vmem:[%s6] sm:$0xf]
        %v924 = vld [vmem:[%s6 + $0x4] sm:$0xf]
        %v925 = vld [vmem:[%s6 + $0x8] sm:$0xf]
        %v926 = vld [vmem:[%s6 + $0xc] sm:$0xf]
        %v931 = vunpack.c.l.b16 %v923
        %v932 = vunpack.c.l.b16 %v924
        %v933 = vunpack.c.l.b16 %v925
        %v934 = vunpack.c.l.b16 %v926
        %v935 = vpack.c.b16 %v932, %v931
        %v936 = vpack.c.b16 %v934, %v933
        %v940 = vsel %vm734, %v918, 0
        %v943 = vsel %vm734, %v919, 0
        %v946 = vsel %vm734, %v920, 0
        %v949 = vsel %vm734, %v921, 0
        %v952 = vsel %vm734, %v922, 0
        %954 = vmatprep.subr.bf16.mxu0 0
        %955 = vmatpush1.bf16.msra.mxu0 %v935
        %956 = vmatprep.subr.bf16.mxu0 0
        %957 = vmatpush1.bf16.msra.mxu0 %v936
        %958 = vmatprep.subr.bf16.mxu0 0
        %959 = vmatpush1.bf16.msra.mxu0 0
        %960 = vmatprep.subr.bf16.mxu0 0
        %961 = vmatpush1.bf16.msra.mxu0 0
        %962 = vmatprep.subr.bf16.mxu0 0
        %963 = vmatpush1.bf16.msra.mxu0 0
        %964 = vmatprep.subr.bf16.mxu0 0
        %965 = vmatpush1.bf16.msra.mxu0 0
        %966 = vmatprep.subr.bf16.mxu0 0
        %967 = vmatpush1.bf16.msra.mxu0 0
        %968 = vmatprep.subr.bf16.mxu0 0
        %969 = vmatpush1.bf16.msra.mxu0 0
        %970 = vmatprep.subr.bf16.mxu0 0
        %971 = vmatpush1.bf16.msra.mxu0 0
        %972 = vmatprep.subr.bf16.mxu0 0
        %973 = vmatpush1.bf16.msra.mxu0 0
        %974 = vmatprep.subr.bf16.mxu0 0
        %975 = vmatpush1.bf16.msra.mxu0 0
        %976 = vmatprep.subr.bf16.mxu0 0
        %977 = vmatpush1.bf16.msra.mxu0 0
        %978 = vmatprep.subr.bf16.mxu0 0
        %979 = vmatpush1.bf16.msra.mxu0 0
        %980 = vmatprep.subr.bf16.mxu0 0
        %981 = vmatpush1.bf16.msra.mxu0 0
        %982 = vmatprep.subr.bf16.mxu0 0
        %983 = vmatpush1.bf16.msra.mxu0 0
        %984 = vmatprep.subr.bf16.mxu0 0
        %985 = vmatpush1.bf16.msra.mxu0 0
        %986 = vmatprep.mubr.bf16.mxu0 0
        %987 = vmatmul.mubr.bf16.gmra.mrb[0].mxu0 %v940
        %v988 = vpop.f32.mrb[0].mxu0
        %v989 = vadd.f32 0.0, %v988
        %v990 = vpop.f32.mrb[0].mxu0
        %v991 = vpop.f32.mrb[0].mxu0
        %v992 = vadd.f32 0.0, %v991
        %v993 = vpop.f32.mrb[0].mxu0
        %994 = vmatprep.mubr.bf16.mxu0 0
        %995 = vmatmul.mubr.bf16.gmra.mrb[0].mxu0 %v943
        %v996 = vpop.f32.mrb[0].mxu0
        %v997 = vadd.f32 0.0, %v996
        %v998 = vpop.f32.mrb[0].mxu0
        %v999 = vpop.f32.mrb[0].mxu0
        %v1000 = vadd.f32 0.0, %v999
        %v1001 = vpop.f32.mrb[0].mxu0
        %1002 = vmatprep.mubr.bf16.mxu0 0
        %1003 = vmatmul.mubr.bf16.gmra.mrb[0].mxu0 %v946
        %v1004 = vpop.f32.mrb[0].mxu0
        %v1005 = vadd.f32 0.0, %v1004
        %v1006 = vpop.f32.mrb[0].mxu0
        %v1007 = vpop.f32.mrb[0].mxu0
        %v1008 = vadd.f32 0.0, %v1007
        %v1009 = vpop.f32.mrb[0].mxu0
        %1010 = vmatprep.mubr.bf16.mxu0 0
        %1011 = vmatmul.mubr.bf16.gmra.mrb[0].mxu0 %v949
        %v1012 = vpop.f32.mrb[0].mxu0
        %v1013 = vadd.f32 0.0, %v1012
        %v1014 = vpop.f32.mrb[0].mxu0
        %v1015 = vpop.f32.mrb[0].mxu0
        %v1016 = vadd.f32 0.0, %v1015
        %v1017 = vpop.f32.mrb[0].mxu0
        %1018 = vmatprep.mubr.bf16.mxu0 0
        %1019 = vmatmul.mubr.bf16.gmra.mrb[0].mxu0 %v952
        %v1020 = vpop.f32.mrb[0].mxu0
        %v1021 = vadd.f32 0.0, %v1020
        %v1022 = vpop.f32.mrb[0].mxu0
        %v1023 = vpop.f32.mrb[0].mxu0
        %v1024 = vpop.f32.mrb[0].mxu0
        %1025 = vdwg.mxu0
        %v1026 = vpack.c.bf16 %v992, %v989
        %v1027 = vpack.c.bf16 %v1000, %v997
        %v1028 = vpack.c.bf16 %v1008, %v1005
        %v1029 = vpack.c.bf16 %v1016, %v1013
        %v1030 = vpack.c.bf16 %v1021, %v1021
        %v1031 = vld [vmem:[%s7] sm:$0x1]
        %v1033 = vlaneseq
        %v1034 = vshrl.u32 %v1033, 7
        %v1035 = vsub.s32 0, %v1034
        %v1036 = vrot.slane %v1031, %v1035
        %v1039 = vsel %vm628, %v1030, 0
        %1041 = vmatprep.subr.bf16.mxu0 0
        %1042 = vmatpush1.bf16.msra.mxu0 %v1026
        %1043 = vmatprep.subr.bf16.mxu0 0
        %1044 = vmatpush1.bf16.msra.mxu0 %v1027
        %1045 = vmatprep.subr.bf16.mxu0 0
        %1046 = vmatpush1.bf16.msra.mxu0 %v1028
        %1047 = vmatprep.subr.bf16.mxu0 0
        %1048 = vmatpush1.bf16.msra.mxu0 %v1029
        %1049 = vmatprep.subr.bf16.mxu0 0
        %1050 = vmatpush1.bf16.msra.mxu0 %v1039
        %1051 = vmatprep.subr.bf16.mxu0 0
        %1052 = vmatpush1.bf16.msra.mxu0 0
        %1053 = vmatprep.subr.bf16.mxu0 0
        %1054 = vmatpush1.bf16.msra.mxu0 0
        %1055 = vmatprep.subr.bf16.mxu0 0
        %1056 = vmatpush1.bf16.msra.mxu0 0
        %1057 = vmatprep.subr.bf16.mxu0 0
        %1058 = vmatpush1.bf16.msra.mxu0 0
        %1059 = vmatprep.subr.bf16.mxu0 0
        %1060 = vmatpush1.bf16.msra.mxu0 0
        %1061 = vmatprep.subr.bf16.mxu0 0
        %1062 = vmatpush1.bf16.msra.mxu0 0
        %1063 = vmatprep.subr.bf16.mxu0 0
        %1064 = vmatpush1.bf16.msra.mxu0 0
        %1065 = vmatprep.subr.bf16.mxu0 0
        %1066 = vmatpush1.bf16.msra.mxu0 0
        %1067 = vmatprep.subr.bf16.mxu0 0
        %1068 = vmatpush1.bf16.msra.mxu0 0
        %1069 = vmatprep.subr.bf16.mxu0 0
        %1070 = vmatpush1.bf16.msra.mxu0 0
        %1071 = vmatprep.subr.bf16.mxu0 0
        %1072 = vmatpush1.bf16.msra.mxu0 0
        %1073 = vmatprep.mubr.bf16.mxu0 0
        %1074 = vmatmul.mubr.bf16.gmra.mrb[0].mxu0 %v614
        %v1075 = vpop.f32.mrb[0].mxu0
        %v1076 = vadd.f32 %v1036, %v1075
        %v1077 = vpop.f32.mrb[0].mxu0
        %v1078 = vpop.f32.mrb[0].mxu0
        %v1079 = vadd.f32 %v1036, %v1078
        %v1080 = vpop.f32.mrb[0].mxu0
        %1081 = vmatprep.mubr.bf16.mxu0 0
        %1082 = vmatmul.mubr.bf16.gmra.mrb[0].mxu0 %v617
        %v1083 = vpop.f32.mrb[0].mxu0
        %v1084 = vadd.f32 %v1036, %v1083
        %v1085 = vpop.f32.mrb[0].mxu0
        %v1086 = vpop.f32.mrb[0].mxu0
        %v1087 = vadd.f32 %v1036, %v1086
        %v1088 = vpop.f32.mrb[0].mxu0
        %1089 = vmatprep.mubr.bf16.mxu0 0
        %1090 = vmatmul.mubr.bf16.gmra.mrb[0].mxu0 %v620
        %v1091 = vpop.f32.mrb[0].mxu0
        %v1092 = vadd.f32 %v1036, %v1091
        %v1093 = vpop.f32.mrb[0].mxu0
        %v1094 = vpop.f32.mrb[0].mxu0
        %v1095 = vadd.f32 %v1036, %v1094
        %v1096 = vpop.f32.mrb[0].mxu0
        %1097 = vmatprep.mubr.bf16.mxu0 0
        %1098 = vmatmul.mubr.bf16.gmra.mrb[0].mxu0 %v623
        %v1099 = vpop.f32.mrb[0].mxu0
        %v1100 = vadd.f32 %v1036, %v1099
        %v1101 = vpop.f32.mrb[0].mxu0
        %v1102 = vpop.f32.mrb[0].mxu0
        %v1103 = vadd.f32 %v1036, %v1102
        %v1104 = vpop.f32.mrb[0].mxu0
        %1105 = vmatprep.mubr.bf16.mxu0 0
        %1106 = vmatmul.mubr.bf16.gmra.mrb[0].mxu0 %v626
        %v1107 = vpop.f32.mrb[0].mxu0
        %v1108 = vadd.f32 %v1036, %v1107
        %v1109 = vpop.f32.mrb[0].mxu0
        %v1110 = vpop.f32.mrb[0].mxu0
        %v1111 = vpop.f32.mrb[0].mxu0
        %1112 = vdwg.mxu0
        %v1113 = vmax.f32 %v1076, 0.0
        %v1114 = vmax.f32 %v1079, 0.0
        %v1115 = vmax.f32 %v1084, 0.0
        %v1116 = vmax.f32 %v1087, 0.0
        %v1117 = vmax.f32 %v1092, 0.0
        %v1118 = vmax.f32 %v1095, 0.0
        %v1119 = vmax.f32 %v1100, 0.0
        %v1120 = vmax.f32 %v1103, 0.0
        %v1121 = vmax.f32 %v1108, 0.0
        %v1122 = vpack.c.bf16 %v1114, %v1113
        %v1123 = vpack.c.bf16 %v1116, %v1115
        %v1124 = vpack.c.bf16 %v1118, %v1117
        %v1125 = vpack.c.bf16 %v1120, %v1119
        %v1126 = vpack.c.bf16 %v1121, %v1121
        %v1127 = vld [vmem:[%s8] sm:$0xf]
        %v1128 = vld [vmem:[%s8 + $0x4] sm:$0xf]
        %v1131 = vunpack.c.l.b16 %v1127
        %v1132 = vunpack.c.l.b16 %v1128
        %v1133 = vpack.c.b16 %v1132, %v1131
        %vm1135 = vcmask 130048
        %v1137 = vsel %vm1135, %v1122, 0
        %v1140 = vsel %vm1135, %v1123, 0
        %v1143 = vsel %vm1135, %v1124, 0
        %v1146 = vsel %vm1135, %v1125, 0
        %v1149 = vsel %vm1135, %v1126, 0
        %1151 = vmatprep.subr.bf16.mxu0 0
        %1152 = vmatpush1.bf16.msra.mxu0 %v1133
        %1153 = vmatprep.subr.bf16.mxu0 0
        %1154 = vmatpush1.bf16.msra.mxu0 0
        %1155 = vmatprep.subr.bf16.mxu0 0
        %1156 = vmatpush1.bf16.msra.mxu0 0
        %1157 = vmatprep.subr.bf16.mxu0 0
        %1158 = vmatpush1.bf16.msra.mxu0 0
        %1159 = vmatprep.subr.bf16.mxu0 0
        %1160 = vmatpush1.bf16.msra.mxu0 0
        %1161 = vmatprep.subr.bf16.mxu0 0
        %1162 = vmatpush1.bf16.msra.mxu0 0
        %1163 = vmatprep.subr.bf16.mxu0 0
        %1164 = vmatpush1.bf16.msra.mxu0 0
        %1165 = vmatprep.subr.bf16.mxu0 0
        %1166 = vmatpush1.bf16.msra.mxu0 0
        %1167 = vmatprep.subr.bf16.mxu0 0
        %1168 = vmatpush1.bf16.msra.mxu0 0
        %1169 = vmatprep.subr.bf16.mxu0 0
        %1170 = vmatpush1.bf16.msra.mxu0 0
        %1171 = vmatprep.subr.bf16.mxu0 0
        %1172 = vmatpush1.bf16.msra.mxu0 0
        %1173 = vmatprep.subr.bf16.mxu0 0
        %1174 = vmatpush1.bf16.msra.mxu0 0
        %1175 = vmatprep.subr.bf16.mxu0 0
        %1176 = vmatpush1.bf16.msra.mxu0 0
        %1177 = vmatprep.subr.bf16.mxu0 0
        %1178 = vmatpush1.bf16.msra.mxu0 0
        %1179 = vmatprep.subr.bf16.mxu0 0
        %1180 = vmatpush1.bf16.msra.mxu0 0
        %1181 = vmatprep.subr.bf16.mxu0 0
        %1182 = vmatpush1.bf16.msra.mxu0 0
        %1183 = vmatprep.mubr.bf16.mxu0 0
        %1184 = vmatmul.mubr.bf16.gmra.mrb[0].mxu0 %v1137
        %v1185 = vpop.f32.mrb[0].mxu0
        %v1186 = vadd.f32 0.0, %v1185
        %v1187 = vpop.f32.mrb[0].mxu0
        %v1188 = vpop.f32.mrb[0].mxu0
        %v1189 = vadd.f32 0.0, %v1188
        %v1190 = vpop.f32.mrb[0].mxu0
        %1191 = vmatprep.mubr.bf16.mxu0 0
        %1192 = vmatmul.mubr.bf16.gmra.mrb[0].mxu0 %v1140
        %v1193 = vpop.f32.mrb[0].mxu0
        %v1194 = vadd.f32 0.0, %v1193
        %v1195 = vpop.f32.mrb[0].mxu0
        %v1196 = vpop.f32.mrb[0].mxu0
        %v1197 = vadd.f32 0.0, %v1196
        %v1198 = vpop.f32.mrb[0].mxu0
        %1199 = vmatprep.mubr.bf16.mxu0 0
        %1200 = vmatmul.mubr.bf16.gmra.mrb[0].mxu0 %v1143
        %v1201 = vpop.f32.mrb[0].mxu0
        %v1202 = vadd.f32 0.0, %v1201
        %v1203 = vpop.f32.mrb[0].mxu0
        %v1204 = vpop.f32.mrb[0].mxu0
        %v1205 = vadd.f32 0.0, %v1204
        %v1206 = vpop.f32.mrb[0].mxu0
        %1207 = vmatprep.mubr.bf16.mxu0 0
        %1208 = vmatmul.mubr.bf16.gmra.mrb[0].mxu0 %v1146
        %v1209 = vpop.f32.mrb[0].mxu0
        %v1210 = vadd.f32 0.0, %v1209
        %v1211 = vpop.f32.mrb[0].mxu0
        %v1212 = vpop.f32.mrb[0].mxu0
        %v1213 = vadd.f32 0.0, %v1212
        %v1214 = vpop.f32.mrb[0].mxu0
        %1215 = vmatprep.mubr.bf16.mxu0 0
        %1216 = vmatmul.mubr.bf16.gmra.mrb[0].mxu0 %v1149
        %v1217 = vpop.f32.mrb[0].mxu0
        %v1218 = vadd.f32 0.0, %v1217
        %v1219 = vpop.f32.mrb[0].mxu0
        %v1220 = vpop.f32.mrb[0].mxu0
        %v1221 = vpop.f32.mrb[0].mxu0
        %1222 = vdwg.mxu0
        %v1223 = vpack.c.bf16 %v1189, %v1186
        %v1224 = vpack.c.bf16 %v1197, %v1194
        %v1225 = vpack.c.bf16 %v1205, %v1202
        %v1226 = vpack.c.bf16 %v1213, %v1210
        %v1227 = vpack.c.bf16 %v1218, %v1218
        %v1228 = vld [vmem:[%s9] sm:$0x1]
        %v1230 = vlaneseq
        %v1231 = vshrl.u32 %v1230, 7
        %v1232 = vsub.s32 0, %v1231
        %v1233 = vrot.slane %v1228, %v1232
        %v1236 = vsel %vm628, %v1227, 0
        %1238 = vmatprep.subr.bf16.mxu0 0
        %1239 = vmatpush1.bf16.msra.mxu0 %v1223
        %1240 = vmatprep.subr.bf16.mxu0 0
        %1241 = vmatpush1.bf16.msra.mxu0 %v1224
        %1242 = vmatprep.subr.bf16.mxu0 0
        %1243 = vmatpush1.bf16.msra.mxu0 %v1225
        %1244 = vmatprep.subr.bf16.mxu0 0
        %1245 = vmatpush1.bf16.msra.mxu0 %v1226
        %1246 = vmatprep.subr.bf16.mxu0 0
        %1247 = vmatpush1.bf16.msra.mxu0 %v1236
        %1248 = vmatprep.subr.bf16.mxu0 0
        %1249 = vmatpush1.bf16.msra.mxu0 0
        %1250 = vmatprep.subr.bf16.mxu0 0
        %1251 = vmatpush1.bf16.msra.mxu0 0
        %1252 = vmatprep.subr.bf16.mxu0 0
        %1253 = vmatpush1.bf16.msra.mxu0 0
        %1254 = vmatprep.subr.bf16.mxu0 0
        %1255 = vmatpush1.bf16.msra.mxu0 0
        %1256 = vmatprep.subr.bf16.mxu0 0
        %1257 = vmatpush1.bf16.msra.mxu0 0
        %1258 = vmatprep.subr.bf16.mxu0 0
        %1259 = vmatpush1.bf16.msra.mxu0 0
        %1260 = vmatprep.subr.bf16.mxu0 0
        %1261 = vmatpush1.bf16.msra.mxu0 0
        %1262 = vmatprep.subr.bf16.mxu0 0
        %1263 = vmatpush1.bf16.msra.mxu0 0
        %1264 = vmatprep.subr.bf16.mxu0 0
        %1265 = vmatpush1.bf16.msra.mxu0 0
        %1266 = vmatprep.subr.bf16.mxu0 0
        %1267 = vmatpush1.bf16.msra.mxu0 0
        %1268 = vmatprep.subr.bf16.mxu0 0
        %1269 = vmatpush1.bf16.msra.mxu0 0
        %1270 = vmatprep.mubr.bf16.mxu0 0
        %1271 = vmatmul.mubr.bf16.gmra.mrb[0].mxu0 %v614
        %v1272 = vpop.f32.mrb[0].mxu0
        %v1273 = vadd.f32 %v1233, %v1272
        %v1274 = vpop.f32.mrb[0].mxu0
        %v1275 = vpop.f32.mrb[0].mxu0
        %v1276 = vadd.f32 %v1233, %v1275
        %v1277 = vpop.f32.mrb[0].mxu0
        %1278 = vmatprep.mubr.bf16.mxu0 0
        %1279 = vmatmul.mubr.bf16.gmra.mrb[0].mxu0 %v617
        %v1280 = vpop.f32.mrb[0].mxu0
        %v1281 = vadd.f32 %v1233, %v1280
        %v1282 = vpop.f32.mrb[0].mxu0
        %v1283 = vpop.f32.mrb[0].mxu0
        %v1284 = vadd.f32 %v1233, %v1283
        %v1285 = vpop.f32.mrb[0].mxu0
        %1286 = vmatprep.mubr.bf16.mxu0 0
        %1287 = vmatmul.mubr.bf16.gmra.mrb[0].mxu0 %v620
        %v1288 = vpop.f32.mrb[0].mxu0
        %v1289 = vadd.f32 %v1233, %v1288
        %v1290 = vpop.f32.mrb[0].mxu0
        %v1291 = vpop.f32.mrb[0].mxu0
        %v1292 = vadd.f32 %v1233, %v1291
        %v1293 = vpop.f32.mrb[0].mxu0
        %1294 = vmatprep.mubr.bf16.mxu0 0
        %1295 = vmatmul.mubr.bf16.gmra.mrb[0].mxu0 %v623
        %v1296 = vpop.f32.mrb[0].mxu0
        %v1297 = vadd.f32 %v1233, %v1296
        %v1298 = vpop.f32.mrb[0].mxu0
        %v1299 = vpop.f32.mrb[0].mxu0
        %v1300 = vadd.f32 %v1233, %v1299
        %v1301 = vpop.f32.mrb[0].mxu0
        %1302 = vmatprep.mubr.bf16.mxu0 0
        %1303 = vmatmul.mubr.bf16.gmra.mrb[0].mxu0 %v626
        %v1304 = vpop.f32.mrb[0].mxu0
        %v1305 = vadd.f32 %v1233, %v1304
        %v1306 = vpop.f32.mrb[0].mxu0
        %v1307 = vpop.f32.mrb[0].mxu0
        %v1308 = vpop.f32.mrb[0].mxu0
        %1309 = vdwg.mxu0
        %v1310 = vmax.f32 %v1273, 0.0
        %v1311 = vmax.f32 %v1276, 0.0
        %v1312 = vmax.f32 %v1281, 0.0
        %v1313 = vmax.f32 %v1284, 0.0
        %v1314 = vmax.f32 %v1289, 0.0
        %v1315 = vmax.f32 %v1292, 0.0
        %v1316 = vmax.f32 %v1297, 0.0
        %v1317 = vmax.f32 %v1300, 0.0
        %v1318 = vmax.f32 %v1305, 0.0
        %v1319 = vld [vmem:[%s11] sm:$0x1]
        %v1320 = vld [vmem:[%s10] sm:$0xff]
        %v1321 = vld [vmem:[%s10 + $0x8] sm:$0xff]
        %v1322 = vld [vmem:[%s10 + $0x10] sm:$0xff]
        %v1323 = vld [vmem:[%s10 + $0x18] sm:$0xff]
        %v1324 = vld [vmem:[%s10 + $0x20] sm:$0xff]
        %v1325 = vld [vmem:[%s10 + $0x28] sm:$0xff]
        %v1326 = vld [vmem:[%s10 + $0x30] sm:$0xff]
        %v1327 = vld [vmem:[%s10 + $0x38] sm:$0xff]
        %v1328 = vld [vmem:[%s10 + $0x40] sm:$0x3]
        %1330 = vset.pattern.permute.xlu0 0
        %1331 = vperm.xlu0 %1330, %v1310
        %v1332 = vpop.permute.xlu0 %1331
        %1335 = vset.pattern.permute.xlu0 0
        %1336 = vperm.xlu0 %1335, %v1311
        %v1337 = vpop.permute.xlu0 %1336
        %1340 = vset.pattern.permute.xlu0 0
        %1341 = vperm.xlu0 %1340, %v1312
        %v1342 = vpop.permute.xlu0 %1341
        %1345 = vset.pattern.permute.xlu0 0
        %1346 = vperm.xlu0 %1345, %v1313
        %v1347 = vpop.permute.xlu0 %1346
        %1350 = vset.pattern.permute.xlu0 0
        %1351 = vperm.xlu0 %1350, %v1314
        %v1352 = vpop.permute.xlu0 %1351
        %1355 = vset.pattern.permute.xlu0 0
        %1356 = vperm.xlu0 %1355, %v1315
        %v1357 = vpop.permute.xlu0 %1356
        %1360 = vset.pattern.permute.xlu0 0
        %1361 = vperm.xlu0 %1360, %v1316
        %v1362 = vpop.permute.xlu0 %1361
        %1365 = vset.pattern.permute.xlu0 0
        %1366 = vperm.xlu0 %1365, %v1317
        %v1367 = vpop.permute.xlu0 %1366
        %1370 = vset.pattern.permute.xlu0 0
        %1371 = vperm.xlu0 %1370, %v1318
        %v1372 = vpop.permute.xlu0 %1371
        %v1374 = vmul.f32 %v1332, %v1320
        %v1375 = vmul.f32 %v1337, %v1321
        %v1376 = vmul.f32 %v1342, %v1322
        %v1377 = vmul.f32 %v1347, %v1323
        %v1378 = vmul.f32 %v1352, %v1324
        %v1379 = vmul.f32 %v1357, %v1325
        %v1380 = vmul.f32 %v1362, %v1326
        %v1381 = vmul.f32 %v1367, %v1327
        %v1382 = vmul.f32 %v1372, %v1328
        %vm1383 = vcmask 15360
        %v1384 = vsel %vm1383, %v1374, 0.0
        %v1385 = vsel %vm1383, %v1375, 0.0
        %v1386 = vadd.f32 %v1384, %v1385
        %v1387 = vsel %vm1383, %v1376, 0.0
        %v1388 = vadd.f32 %v1386, %v1387
        %v1389 = vsel %vm1383, %v1377, 0.0
        %v1390 = vadd.f32 %v1388, %v1389
        %v1391 = vsel %vm1383, %v1378, 0.0
        %v1392 = vadd.f32 %v1390, %v1391
        %v1393 = vsel %vm1383, %v1379, 0.0
        %v1394 = vadd.f32 %v1392, %v1393
        %v1395 = vsel %vm1383, %v1380, 0.0
        %v1396 = vadd.f32 %v1394, %v1395
        %v1397 = vsel %vm1383, %v1381, 0.0
        %v1398 = vadd.f32 %v1396, %v1397
        %vm1399 = vcmask 9216
        %v1400 = vsel %vm1399, %v1382, 0.0
        %v1401 = vadd.f32 %v1398, %v1400
        %v1402 = vrot.slane %v1401, 4
        %v1403 = vadd.f32 %v1401, %v1402
        %v1404 = vrot.slane %v1403, 2
        %v1405 = vadd.f32 %v1403, %v1404
        %v1406 = vrot.slane %v1405, 1
        %v1407 = vadd.f32 %v1405, %v1406
        %v1408 = vadd.f32 %v1319, %v1407
        %s1409 = scalar_lea.vmem %s10, 72
        %v1410 = vld [vmem:[%s1409] sm:$0xff]
        %v1411 = vld [vmem:[%s1409 + $0x8] sm:$0xff]
        %v1412 = vld [vmem:[%s1409 + $0x10] sm:$0xff]
        %v1413 = vld [vmem:[%s1409 + $0x18] sm:$0xff]
        %v1414 = vld [vmem:[%s1409 + $0x20] sm:$0xff]
        %v1415 = vld [vmem:[%s1409 + $0x28] sm:$0xff]
        %v1416 = vld [vmem:[%s1409 + $0x30] sm:$0xff]
        %v1417 = vld [vmem:[%s1409 + $0x38] sm:$0xff]
        %v1418 = vld [vmem:[%s1409 + $0x40] sm:$0x3]
        %1419 = vset.pattern.permute.xlu0 1
        %1420 = vperm.xlu0 %1419, %v1310
        %v1421 = vpop.permute.xlu0 %1420
        %1423 = vset.pattern.permute.xlu0 1
        %1424 = vperm.xlu0 %1423, %v1311
        %v1425 = vpop.permute.xlu0 %1424
        %1427 = vset.pattern.permute.xlu0 1
        %1428 = vperm.xlu0 %1427, %v1312
        %v1429 = vpop.permute.xlu0 %1428
        %1431 = vset.pattern.permute.xlu0 1
        %1432 = vperm.xlu0 %1431, %v1313
        %v1433 = vpop.permute.xlu0 %1432
        %1435 = vset.pattern.permute.xlu0 1
        %1436 = vperm.xlu0 %1435, %v1314
        %v1437 = vpop.permute.xlu0 %1436
        %1439 = vset.pattern.permute.xlu0 1
        %1440 = vperm.xlu0 %1439, %v1315
        %v1441 = vpop.permute.xlu0 %1440
        %1443 = vset.pattern.permute.xlu0 1
        %1444 = vperm.xlu0 %1443, %v1316
        %v1445 = vpop.permute.xlu0 %1444
        %1447 = vset.pattern.permute.xlu0 1
        %1448 = vperm.xlu0 %1447, %v1317
        %v1449 = vpop.permute.xlu0 %1448
        %1451 = vset.pattern.permute.xlu0 1
        %1452 = vperm.xlu0 %1451, %v1318
        %v1453 = vpop.permute.xlu0 %1452
        %v1455 = vmul.f32 %v1421, %v1410
        %v1456 = vmul.f32 %v1425, %v1411
        %v1457 = vmul.f32 %v1429, %v1412
        %v1458 = vmul.f32 %v1433, %v1413
        %v1459 = vmul.f32 %v1437, %v1414
        %v1460 = vmul.f32 %v1441, %v1415
        %v1461 = vmul.f32 %v1445, %v1416
        %v1462 = vmul.f32 %v1449, %v1417
        %v1463 = vmul.f32 %v1453, %v1418
        %v1464 = vsel %vm1383, %v1455, 0.0
        %v1465 = vsel %vm1383, %v1456, 0.0
        %v1466 = vadd.f32 %v1464, %v1465
        %v1467 = vsel %vm1383, %v1457, 0.0
        %v1468 = vadd.f32 %v1466, %v1467
        %v1469 = vsel %vm1383, %v1458, 0.0
        %v1470 = vadd.f32 %v1468, %v1469
        %v1471 = vsel %vm1383, %v1459, 0.0
        %v1472 = vadd.f32 %v1470, %v1471
        %v1473 = vsel %vm1383, %v1460, 0.0
        %v1474 = vadd.f32 %v1472, %v1473
        %v1475 = vsel %vm1383, %v1461, 0.0
        %v1476 = vadd.f32 %v1474, %v1475
        %v1477 = vsel %vm1383, %v1462, 0.0
        %v1478 = vadd.f32 %v1476, %v1477
        %v1479 = vsel %vm1399, %v1463, 0.0
        %v1480 = vadd.f32 %v1478, %v1479
        %v1481 = vrot.slane %v1480, 4
        %v1482 = vadd.f32 %v1480, %v1481
        %v1483 = vrot.slane %v1482, 2
        %v1484 = vadd.f32 %v1482, %v1483
        %v1485 = vrot.slane %v1484, 1
        %v1486 = vadd.f32 %v1484, %v1485
        %v1487 = vadd.f32 %v1408, %v1486
        %vm1488 = vcmask 8192
        %v1489 = vsel %vm1488, %v1487, -inf
        %1490 = vmax.xlane.f32.xlu0 %v1489
        %v1491 = vpop.xlane.xlu0 %1490
        %v1492 = vsub.f32 %v1487, %v1491
        %v1493 = vmul.f32 %v1492, 1.442695
        %v1494 = vpow.pop %v1493
        %v1495 = vsel %vm1488, %v1494, 0.0
        %1496 = vadd.xlane.f32.xlu0 %v1495
        %v1497 = vpop.xlane.xlu0 %1496
        %v1498 = vrcp.pop %v1497
        %v1499 = vmul.f32 %v1494, %v1498
        %1500 = vst.msk [vmem:[%s420] sm:$0x1] %vm1488, %v1499
        %s1501 = sand.u32 %s296, 1
        %s1502 = scalar_lea.sflag [#allocation3], %s1501
        %s1503 = sand.u32 %s296, 1
        %s1504 = scalar_lea.vmem [#allocation2], %s1503
        // Predicated region
        $region69: #{_lambda_.1} parent=67 // pred_check
          %p1505 = pneg %p306
        $region70: #{_lambda_.1} parent=67 // pred_check_branch
          %1507 = sbr.rel (%p1505) target = $region72
        $region71: #{_lambda_.1} parent=67 // pred_region
          %s1509 = ssub.s32 16, 16
          %1510 = vsyncadd %s1502, %s1509
          %s1511 = smul.addr %s26, 16
          %s1512 = scalar_lea.hbm %s12, %s1511
          %s1514 = sshll.u32 %s1504, 4
          %s1515 = int_to_ptr.vmem [resolvable:$true] %s1514
          %1517 = dma.vmem_to_hbm [thread:$0]  %s1515, 16, %s1512, %s1502
        $region72: #{_lambda_.1} parent=67 // pred_fallthru
          _
      $region68: #{_lambda_.1} parent=5 // pred_fallthru
        _
      %p1518 = scmp.le.s32.totalorder 2, %s21
      // Predicated region
      $region73: #{_lambda_.1} parent=5 // pred_check
        %p1519 = pneg %p1518
      $region74: #{_lambda_.1} parent=5 // pred_check_branch
        %1521 = sbr.rel (%p1519) target = $region76
      $region75: #{_lambda_.1} parent=5 // pred_region
        %s1522 = ssub.s32 %s21, 2
        // Predicated region
        $region77: #{_lambda_.1} parent=75 // pred_check
          %p1523 = pneg %p312
        $region78: #{_lambda_.1} parent=75 // pred_check_branch
          %1525 = sbr.rel (%p1523) target = $region80
        $region79: #{_lambda_.1} parent=75 // pred_region
          %s1526 = sand.u32 %s297, 1
          %s1527 = scalar_lea.sflag [#allocation3], %s1526
          %s1528 = sand.u32 %s297, 1
          %s1529 = scalar_lea.vmem [#allocation2], %s1528
          %1530 = dma.done %s1527, 16
        $region80: #{_lambda_.1} parent=75 // pred_fallthru
          _
      $region76: #{_lambda_.1} parent=5 // pred_fallthru
        _
    $region6: #{_lambda_.1} parent=1 // loop_footer
      %s25 = sadd.s32 1, %s21
    $region7: #{_lambda_.1} parent=1 // loop_footer_branch
      %20 = sbr.rel target = $region3
    $region8: #{_lambda_.1} parent=1 // loop_exit
      _
    %1531 = vsyncpa [#allocation3], 1
    %s1532 = scalar_lea.sflag [#allocation3], 1
    %1533 = vsyncpa %s1532, 1

</llo_original>
